<compile_context>
chip_gen: v7x
topology: tpu7x:2x2x1
jax: 0.10.0
libtpu: 0.0.40
codegen_flags: <defaults>
</compile_context>

<pallas_src>
import jax
import jax.numpy as jnp
import numpy as np
from jax import lax
from jax.experimental import pallas as pl
from jax.experimental.pallas import tpu as pltpu


# ----------------------------------------------------------------------------- kernel
def graph_attention_kernel(nb_ref, feat_ref, x_ref, w_nb_ref, w1s_ref, bias_ref, out_ref):
    # nb_ref  : (K, C, TN)  gathered neighbour rows, N on lanes (f32 or bf16)
    # feat_ref: (K, D, TN)  features to aggregate, N on lanes   (f32 or bf16)
    # x_ref   : (C, TN)     centre rows (x viewed as (B,N,C), transposed), N on lanes
    # w_nb_ref: (D, C)      (W2 - W1) * bn_scale
    # w1s_ref : (D, C)      W1 * bn_scale
    # bias_ref: (D, 1)      folded BN bias (f32)
    # out_ref : (D, TN)     lane-dense output block of the (B, D, N) result
    K = nb_ref.shape[0]
    w_nb = w_nb_ref[...]

    # k-independent centre term (one tiny MXU dot per tile), bias lane-broadcast, hoisted.
    ct = jnp.dot(w1s_ref[...], x_ref[...],
                 preferred_element_type=jnp.float32) + bias_ref[...]          # (D, TN) f32

    # Single-pass online softmax over the K neighbours (K is the leading axis, so every
    # reduction is per-lane elementwise — no cross-lane XLU work).  Only m/den/acc stay live.
    def body(k, carry):
        m, den, acc = carry
        ek = jnp.dot(w_nb, nb_ref[k], preferred_element_type=jnp.float32) + ct
        ek = jnp.maximum(ek, 0.2 * ek)                     # LeakyReLU(0.2)
        m_new = jnp.maximum(m, ek)
        alpha = jnp.exp(m - m_new)                         # EUP slot
        p = jnp.exp(ek - m_new)
        den = alpha * den + p
        acc = alpha * acc + p * feat_ref[k].astype(jnp.float32)
        return m_new, den, acc

    m0 = jnp.full_like(ct, -jnp.inf)
    z0 = jnp.zeros_like(ct)
    _, den, acc = lax.fori_loop(0, K, body, (m0, z0, z0), unroll=True)

    # normalize once at the end (reciprocal on the EUP slot).
    out_ref[...] = (acc * pl.reciprocal(den, approx=True)).astype(out_ref.dtype)


# ----------------------------------------------------------------------------- tiling
def _choose_tile_n(N, K, C, D, in_itemsize, out_itemsize, batch):
    """Generation-aware N-tile + scoped-VMEM choice.

    Accounts for sublane padding, double buffering of all streamed blocks, and the live
    f32 working set (m/den/acc + transients).  v7x has 64 MiB VMEM per TC, v5e/v6e 128 MiB
    (v5e's *default scoped* limit is only 16 MiB, so we always set vmem_limit_bytes)."""
    try:
        vmem_cap = int(pltpu.get_tpu_info().vmem_capacity_bytes)
    except Exception:
        vmem_cap = 64 * 1024 * 1024                      # conservative fallback
    vmem_limit = int(min(vmem_cap * 3 // 4, 96 * 1024 * 1024))
    budget = vmem_limit * 3 // 5                         # headroom for compiler scratch

    def pad(v, m):
        return -(-v // m) * m

    sub_in = 8 * max(4 // in_itemsize, 1)                # 8 rows (f32) / 16 rows (bf16)
    sub_out = 8 * max(4 // out_itemsize, 1)
    per_lane = (
        2 * (K * pad(C, sub_in) + K * pad(D, sub_in) + pad(C, sub_in)) * in_itemsize  # 2x-buffered ins
        + 2 * pad(D, sub_out) * out_itemsize                                          # 2x-buffered out
        + 6 * pad(D, 8) * 4                                                           # live f32 slabs
    )
    tn_max = max(budget // max(per_lane, 1), 128)
    if tn_max >= N:
        tn = int(N)                                      # full axis in one block (always legal)
        if batch == 1 and N >= 256:                      # ensure both v7x TensorCores get work
            tn = int(min(pad(-(-N // 2), 128), tn))
        return tn, vmem_limit
    tn = int(max(128, min((tn_max // 128) * 128, 4096))) # lane-dense multiples of 128
    return tn, vmem_limit


# ----------------------------------------------------------------------------- wrapper
def graph_attention_pallas(neighbor_t, feature_t, x_cn, w_nb, w1s, bias, *,
                           out_dtype=jnp.float32):
    """neighbor_t: (B,K,C,N), feature_t: (B,K,D,N), x_cn: (B,C,N), w_nb/w1s: (D,C),
    bias: (D,1) f32.  Returns (B, D, N) in out_dtype."""
    B, K, C, N = neighbor_t.shape
    D = w_nb.shape[0]
    tn, vmem_limit = _choose_tile_n(
        N, K, C, D, jnp.dtype(neighbor_t.dtype).itemsize, jnp.dtype(out_dtype).itemsize, B)
    nt = pl.cdiv(N, tn)

    return pl.pallas_call(
        graph_attention_kernel,
        out_shape=jax.ShapeDtypeStruct((B, D, N), out_dtype),
        grid=(B, nt),
        in_specs=[
            pl.BlockSpec((None, K, C, tn), lambda b, i: (b, 0, 0, i)),
            pl.BlockSpec((None, K, D, tn), lambda b, i: (b, 0, 0, i)),
            pl.BlockSpec((None, C, tn), lambda b, i: (b, 0, i)),
            pl.BlockSpec((D, C), lambda b, i: (0, 0)),        # constant index -> fetched once
            pl.BlockSpec((D, C), lambda b, i: (0, 0)),
            pl.BlockSpec((D, 1), lambda b, i: (0, 0)),
        ],
        out_specs=pl.BlockSpec((None, D, tn), lambda b, i: (b, 0, i)),
        compiler_params=pltpu.CompilerParams(
            dimension_semantics=("parallel", "parallel"),
            vmem_limit_bytes=vmem_limit,
            # let XLA fuse the feature relayout / x transpose into the input DMA instead of
            # materializing them in HBM (permission-only; XLA still decides).
            allow_input_fusion=[False, True, True, False, False, False],
        ),
    )(neighbor_t, feature_t, x_cn, w_nb, w1s, bias)


def graph_attention_forward(graph_index, x, feature, params, *,
                            compute_dtype=jnp.float32, out_dtype=jnp.float32):
    """Mirror of GraphAttention.forward (eval-mode BatchNorm).

    graph_index: (B, N, K) int32
    x          : (B, C, N) f32
    feature    : (B, D, N, K) f32
    returns    : (B, D, N)
    """
    B, C, N = x.shape
    K = graph_index.shape[-1]
    w_conv, gamma, beta, run_mean, run_var, eps = params
    D = w_conv.shape[0]

    # torch: x.contiguous().view(B, N, C) -> raw row-major reshape (NOT a transpose).
    xr = x.reshape(B, N, C)
    x_cn = jnp.swapaxes(xr, 1, 2)                             # (B, C, N): N on lanes

    # ---- fold eval-mode BatchNorm into the 1x1 conv weight ---------------------------
    w2 = w_conv[:, :, 0, 0]                                   # (D, 2C)
    scale = gamma / jnp.sqrt(run_var + eps)                   # (D,)
    bias = (beta - run_mean * scale)[:, None].astype(jnp.float32)   # (D, 1)
    w1s = w2[:, :C] * scale[:, None]                          # acts on (centre - neighbour)
    w2s = w2[:, C:] * scale[:, None]                          # acts on neighbour
    # e = (c - n) @ W1s + n @ W2s + bias  =  c @ W1s + bias  +  n @ (W2s - W1s)
    w_nb = (w2s - w1s).astype(compute_dtype)                  # (D, C), streamed to kernel
    w1s = w1s.astype(compute_dtype)

    # ---- neighbour gather (index_points), laid out (B, K, C, N): N on lanes ----------
    # TODO(synk): measure-first — scalar-prefetch graph_index + in-kernel gather would avoid
    # materializing this Kx-sized tensor in HBM (worthwhile on v5e, maybe not on v7x).
    gi_t = jnp.swapaxes(graph_index, 1, 2)                    # (B, K, N)
    idx = jnp.broadcast_to(gi_t[:, :, None, :], (B, K, C, N))
    src = jnp.broadcast_to(x_cn[:, None, :, :], (B, K, C, N))
    neighbor_t = jnp.take_along_axis(src, idx, axis=-1).astype(compute_dtype)   # (B,K,C,N)

    # feature (B, D, N, K) -> (B, K, D, N): K leading, N on lanes.  allow_input_fusion lets
    # XLA fold this relayout into the pallas_call input DMA (no standalone HBM round trip).
    feature_t = jnp.transpose(feature, (0, 3, 1, 2)).astype(compute_dtype)

    return graph_attention_pallas(neighbor_t, feature_t, x_cn.astype(compute_dtype),
                                  w_nb, w1s, bias, out_dtype=out_dtype)


# ----------------------------------------------------------------------------- reference
def reference_forward(graph_index, x, feature, params):
    """Pure-JAX f32 reference faithfully replicating the torch forward (eval-mode BN)."""
    B, C, N = x.shape
    K = graph_index.shape[-1]
    w_conv, gamma, beta, run_mean, run_var, eps = params
    xr = x.reshape(B, N, C)
    batch_idx = jnp.arange(B, dtype=jnp.int32)[:, None, None]
    neighbor = xr[batch_idx, graph_index]                                   # (B,N,K,C)
    centre = jnp.broadcast_to(xr[:, :, None, :], (B, N, K, C))
    delta_f = jnp.concatenate([centre - neighbor, neighbor], axis=-1)       # (B,N,K,2C)
    w2 = jnp.transpose(w_conv[:, :, 0, 0], (1, 0))                          # (2C, D)
    e = jnp.einsum("bnkc,cd->bnkd", delta_f, w2)
    scale = gamma / jnp.sqrt(run_var + eps)
    e = e * scale + (beta - run_mean * scale)
    e = jnp.where(e > 0, e, 0.2 * e)                                        # LeakyReLU(0.2)
    att = jax.nn.softmax(e, axis=2)                                         # softmax over K
    feat_p = jnp.transpose(feature, (0, 2, 3, 1))                           # (B,N,K,D)
    gf = jnp.sum(att * feat_p, axis=2)                                      # (B,N,D)
    return jnp.transpose(gf, (0, 2, 1))                                     # (B,D,N)


# ----------------------------------------------------------------------------- demo / check
if __name__ == "__main__":
    # Small shapes consistent with the module: feature_dim=C, out_dim=D, K neighbours.
    B, C, N, K, D = 2, 4, 16, 8, 16
    key = jax.random.PRNGKey(0)
    k1, k2, k3, k4, k5, k6, k7, k8 = jax.random.split(key, 8)

    x = jax.random.normal(k1, (B, C, N), dtype=jnp.float32)
    feature = jax.random.normal(k2, (B, D, N, K), dtype=jnp.float32)
    graph_index = jax.random.randint(k3, (B, N, K), 0, N, dtype=jnp.int32)

    # Conv2d(2C -> D, 1x1, bias=False) + BatchNorm2d(D) parameters (eval mode).
    w_conv = 0.1 * jax.random.normal(k4, (D, 2 * C, 1, 1), dtype=jnp.float32)
    gamma = jax.random.uniform(k5, (D,), jnp.float32, 0.5, 1.5)
    beta = 0.1 * jax.random.normal(k6, (D,), dtype=jnp.float32)
    run_mean = 0.1 * jax.random.normal(k7, (D,), dtype=jnp.float32)
    run_var = jax.random.uniform(k8, (D,), jnp.float32, 0.5, 1.5)
    params = (w_conv, gamma, beta, run_mean, run_var, 1e-5)
    # TODO(synk): self.dropout (p=0.6) is defined in __init__ but never applied in forward.

    ref = jax.block_until_ready(reference_forward(graph_index, x, feature, params))

    fwd = jax.jit(graph_attention_forward, static_argnames=("compute_dtype", "out_dtype"))

    # f32 path (all generations; v5e should stay f32). Tolerance covers approx reciprocal.
    out_f32 = jax.block_until_ready(fwd(graph_index, x, feature, params,
                                        compute_dtype=jnp.float32))
    np.testing.assert_allclose(np.asarray(out_f32), np.asarray(ref), rtol=1e-2, atol=1e-2)
    assert out_f32.shape == (B, D, N)

    # bf16-input path (v6e/v7x bandwidth saver); f32 accumulation, loose sanity bound.
    out_bf16 = jax.block_until_ready(fwd(graph_index, x, feature, params,
                                         compute_dtype=jnp.bfloat16))
    np.testing.assert_allclose(np.asarray(out_bf16), np.asarray(ref), rtol=1e-1, atol=1e-1)

    print("KERNEL_OK")
</pallas_src>

<mosaic_0001>
module attributes {stable_mosaic.version = 11 : i64} {
  func.func @graph_attention_kernel(%arg0: i32, %arg1: i32, %arg2: memref<1x8x4x16xf32, #tpu.memory_space<vmem>>, %arg3: memref<1x8x16x16xf32, #tpu.memory_space<vmem>>, %arg4: memref<1x4x16xf32, #tpu.memory_space<vmem>>, %arg5: memref<16x4xf32, #tpu.memory_space<vmem>>, %arg6: memref<16x4xf32, #tpu.memory_space<vmem>>, %arg7: memref<16x1xf32, #tpu.memory_space<vmem>>, %arg8: memref<1x16x16xf32, #tpu.memory_space<vmem>>) attributes {dimension_semantics = [#tpu.dimension_semantics<parallel>, #tpu.dimension_semantics<parallel>], iteration_bounds = array<i64: 2, 1>, scalar_prefetch = 0 : i64, scratch_operands = 0 : i64, tpu.core_type = #tpu.core_type<tc>, window_params = [{transform_indices = @transform_0, window_bounds = array<i64: 1, 8, 4, 16>}, {transform_indices = @transform_1, window_bounds = array<i64: 1, 8, 16, 16>}, {transform_indices = @transform_2, window_bounds = array<i64: 1, 4, 16>}, {pipeline_mode = #tpu.pipeline_mode<synchronous>, transform_indices = @transform_3, window_bounds = array<i64: 16, 4>}, {pipeline_mode = #tpu.pipeline_mode<synchronous>, transform_indices = @transform_4, window_bounds = array<i64: 16, 4>}, {pipeline_mode = #tpu.pipeline_mode<synchronous>, transform_indices = @transform_5, window_bounds = array<i64: 16, 1>}, {transform_indices = @transform_6, window_bounds = array<i64: 1, 16, 16>}]} {
    %c0 = arith.constant 0 : index
    %c0_0 = arith.constant 0 : index
    %0 = vector.load %arg5[%c0, %c0_0] : memref<16x4xf32, #tpu.memory_space<vmem>>, vector<16x4xf32>
    %c0_1 = arith.constant 0 : index
    %c0_2 = arith.constant 0 : index
    %1 = vector.load %arg6[%c0_1, %c0_2] : memref<16x4xf32, #tpu.memory_space<vmem>>, vector<16x4xf32>
    %c0_3 = arith.constant 0 : index
    %c0_4 = arith.constant 0 : index
    %c0_5 = arith.constant 0 : index
    %2 = vector.load %arg4[%c0_3, %c0_4, %c0_5] : memref<1x4x16xf32, #tpu.memory_space<vmem>>, vector<1x4x16xf32>
    %3 = vector.shape_cast %2 : vector<1x4x16xf32> to vector<4x16xf32>
    %cst = arith.constant dense<0.000000e+00> : vector<16x16xf32>
    %4 = tpu.matmul %1, %3, %cst {dimension_numbers = #tpu.dot_dimension_numbers<[1], [0], [0], [1], [0, 0, 1, 1], [], []>} : vector<16x4xf32>, vector<4x16xf32>, vector<16x16xf32> -> vector<16x16xf32>
    %c0_6 = arith.constant 0 : index
    %c0_7 = arith.constant 0 : index
    %5 = vector.load %arg7[%c0_6, %c0_7] : memref<16x1xf32, #tpu.memory_space<vmem>>, vector<16x1xf32>
    %6 = vector.broadcast %5 : vector<16x1xf32> to vector<16x16xf32>
    %7 = arith.addf %4, %6 : vector<16x16xf32>
    %cst_8 = arith.constant 0xFF800000 : f32
    %8 = vector.broadcast %cst_8 : f32 to vector<16x16xf32>
    %cst_9 = arith.constant 0.000000e+00 : f32
    %9 = vector.broadcast %cst_9 : f32 to vector<16x16xf32>
    %c0_i32 = arith.constant 0 : i32
    %c0_10 = arith.constant 0 : index
    %10 = arith.index_cast %c0_i32 : i32 to index
    %c0_11 = arith.constant 0 : index
    %c0_12 = arith.constant 0 : index
    %11 = vector.load %arg2[%c0_10, %10, %c0_11, %c0_12] : memref<1x8x4x16xf32, #tpu.memory_space<vmem>>, vector<1x1x4x16xf32>
    %12 = vector.shape_cast %11 : vector<1x1x4x16xf32> to vector<4x16xf32>
    %cst_13 = arith.constant dense<0.000000e+00> : vector<16x16xf32>
    %13 = tpu.matmul %0, %12, %cst_13 {dimension_numbers = #tpu.dot_dimension_numbers<[1], [0], [0], [1], [0, 0, 1, 1], [], []>} : vector<16x4xf32>, vector<4x16xf32>, vector<16x16xf32> -> vector<16x16xf32>
    %14 = arith.addf %13, %7 : vector<16x16xf32>
    %cst_14 = arith.constant 2.000000e-01 : f32
    %15 = vector.broadcast %cst_14 : f32 to vector<16x16xf32>
    %16 = arith.mulf %15, %14 : vector<16x16xf32>
    %17 = arith.maximumf %14, %16 : vector<16x16xf32>
    %18 = arith.maximumf %8, %17 : vector<16x16xf32>
    %19 = arith.subf %8, %18 : vector<16x16xf32>
    %20 = math.exp %19 : vector<16x16xf32>
    %21 = arith.subf %17, %18 : vector<16x16xf32>
    %22 = math.exp %21 : vector<16x16xf32>
    %23 = arith.mulf %20, %9 : vector<16x16xf32>
    %24 = arith.addf %23, %22 : vector<16x16xf32>
    %25 = arith.mulf %20, %9 : vector<16x16xf32>
    %c0_15 = arith.constant 0 : index
    %26 = arith.index_cast %c0_i32 : i32 to index
    %c0_16 = arith.constant 0 : index
    %c0_17 = arith.constant 0 : index
    %27 = vector.load %arg3[%c0_15, %26, %c0_16, %c0_17] : memref<1x8x16x16xf32, #tpu.memory_space<vmem>>, vector<1x1x16x16xf32>
    %28 = vector.shape_cast %27 : vector<1x1x16x16xf32> to vector<16x16xf32>
    %29 = arith.mulf %22, %28 : vector<16x16xf32>
    %30 = arith.addf %25, %29 : vector<16x16xf32>
    %c1_i32 = arith.constant 1 : i32
    %c0_18 = arith.constant 0 : index
    %31 = arith.index_cast %c1_i32 : i32 to index
    %c0_19 = arith.constant 0 : index
    %c0_20 = arith.constant 0 : index
    %32 = vector.load %arg2[%c0_18, %31, %c0_19, %c0_20] : memref<1x8x4x16xf32, #tpu.memory_space<vmem>>, vector<1x1x4x16xf32>
    %33 = vector.shape_cast %32 : vector<1x1x4x16xf32> to vector<4x16xf32>
    %cst_21 = arith.constant dense<0.000000e+00> : vector<16x16xf32>
    %34 = tpu.matmul %0, %33, %cst_21 {dimension_numbers = #tpu.dot_dimension_numbers<[1], [0], [0], [1], [0, 0, 1, 1], [], []>} : vector<16x4xf32>, vector<4x16xf32>, vector<16x16xf32> -> vector<16x16xf32>
    %35 = arith.addf %34, %7 : vector<16x16xf32>
    %cst_22 = arith.constant 2.000000e-01 : f32
    %36 = vector.broadcast %cst_22 : f32 to vector<16x16xf32>
    %37 = arith.mulf %36, %35 : vector<16x16xf32>
    %38 = arith.maximumf %35, %37 : vector<16x16xf32>
    %39 = arith.maximumf %18, %38 : vector<16x16xf32>
    %40 = arith.subf %18, %39 : vector<16x16xf32>
    %41 = math.exp %40 : vector<16x16xf32>
    %42 = arith.subf %38, %39 : vector<16x16xf32>
    %43 = math.exp %42 : vector<16x16xf32>
    %44 = arith.mulf %41, %24 : vector<16x16xf32>
    %45 = arith.addf %44, %43 : vector<16x16xf32>
    %46 = arith.mulf %41, %30 : vector<16x16xf32>
    %c0_23 = arith.constant 0 : index
    %47 = arith.index_cast %c1_i32 : i32 to index
    %c0_24 = arith.constant 0 : index
    %c0_25 = arith.constant 0 : index
    %48 = vector.load %arg3[%c0_23, %47, %c0_24, %c0_25] : memref<1x8x16x16xf32, #tpu.memory_space<vmem>>, vector<1x1x16x16xf32>
    %49 = vector.shape_cast %48 : vector<1x1x16x16xf32> to vector<16x16xf32>
    %50 = arith.mulf %43, %49 : vector<16x16xf32>
    %51 = arith.addf %46, %50 : vector<16x16xf32>
    %c2_i32 = arith.constant 2 : i32
    %c0_26 = arith.constant 0 : index
    %52 = arith.index_cast %c2_i32 : i32 to index
    %c0_27 = arith.constant 0 : index
    %c0_28 = arith.constant 0 : index
    %53 = vector.load %arg2[%c0_26, %52, %c0_27, %c0_28] : memref<1x8x4x16xf32, #tpu.memory_space<vmem>>, vector<1x1x4x16xf32>
    %54 = vector.shape_cast %53 : vector<1x1x4x16xf32> to vector<4x16xf32>
    %cst_29 = arith.constant dense<0.000000e+00> : vector<16x16xf32>
    %55 = tpu.matmul %0, %54, %cst_29 {dimension_numbers = #tpu.dot_dimension_numbers<[1], [0], [0], [1], [0, 0, 1, 1], [], []>} : vector<16x4xf32>, vector<4x16xf32>, vector<16x16xf32> -> vector<16x16xf32>
    %56 = arith.addf %55, %7 : vector<16x16xf32>
    %cst_30 = arith.constant 2.000000e-01 : f32
    %57 = vector.broadcast %cst_30 : f32 to vector<16x16xf32>
    %58 = arith.mulf %57, %56 : vector<16x16xf32>
    %59 = arith.maximumf %56, %58 : vector<16x16xf32>
    %60 = arith.maximumf %39, %59 : vector<16x16xf32>
    %61 = arith.subf %39, %60 : vector<16x16xf32>
    %62 = math.exp %61 : vector<16x16xf32>
    %63 = arith.subf %59, %60 : vector<16x16xf32>
    %64 = math.exp %63 : vector<16x16xf32>
    %65 = arith.mulf %62, %45 : vector<16x16xf32>
    %66 = arith.addf %65, %64 : vector<16x16xf32>
    %67 = arith.mulf %62, %51 : vector<16x16xf32>
    %c0_31 = arith.constant 0 : index
    %68 = arith.index_cast %c2_i32 : i32 to index
    %c0_32 = arith.constant 0 : index
    %c0_33 = arith.constant 0 : index
    %69 = vector.load %arg3[%c0_31, %68, %c0_32, %c0_33] : memref<1x8x16x16xf32, #tpu.memory_space<vmem>>, vector<1x1x16x16xf32>
    %70 = vector.shape_cast %69 : vector<1x1x16x16xf32> to vector<16x16xf32>
    %71 = arith.mulf %64, %70 : vector<16x16xf32>
    %72 = arith.addf %67, %71 : vector<16x16xf32>
    %c3_i32 = arith.constant 3 : i32
    %c0_34 = arith.constant 0 : index
    %73 = arith.index_cast %c3_i32 : i32 to index
    %c0_35 = arith.constant 0 : index
    %c0_36 = arith.constant 0 : index
    %74 = vector.load %arg2[%c0_34, %73, %c0_35, %c0_36] : memref<1x8x4x16xf32, #tpu.memory_space<vmem>>, vector<1x1x4x16xf32>
    %75 = vector.shape_cast %74 : vector<1x1x4x16xf32> to vector<4x16xf32>
    %cst_37 = arith.constant dense<0.000000e+00> : vector<16x16xf32>
    %76 = tpu.matmul %0, %75, %cst_37 {dimension_numbers = #tpu.dot_dimension_numbers<[1], [0], [0], [1], [0, 0, 1, 1], [], []>} : vector<16x4xf32>, vector<4x16xf32>, vector<16x16xf32> -> vector<16x16xf32>
    %77 = arith.addf %76, %7 : vector<16x16xf32>
    %cst_38 = arith.constant 2.000000e-01 : f32
    %78 = vector.broadcast %cst_38 : f32 to vector<16x16xf32>
    %79 = arith.mulf %78, %77 : vector<16x16xf32>
    %80 = arith.maximumf %77, %79 : vector<16x16xf32>
    %81 = arith.maximumf %60, %80 : vector<16x16xf32>
    %82 = arith.subf %60, %81 : vector<16x16xf32>
    %83 = math.exp %82 : vector<16x16xf32>
    %84 = arith.subf %80, %81 : vector<16x16xf32>
    %85 = math.exp %84 : vector<16x16xf32>
    %86 = arith.mulf %83, %66 : vector<16x16xf32>
    %87 = arith.addf %86, %85 : vector<16x16xf32>
    %88 = arith.mulf %83, %72 : vector<16x16xf32>
    %c0_39 = arith.constant 0 : index
    %89 = arith.index_cast %c3_i32 : i32 to index
    %c0_40 = arith.constant 0 : index
    %c0_41 = arith.constant 0 : index
    %90 = vector.load %arg3[%c0_39, %89, %c0_40, %c0_41] : memref<1x8x16x16xf32, #tpu.memory_space<vmem>>, vector<1x1x16x16xf32>
    %91 = vector.shape_cast %90 : vector<1x1x16x16xf32> to vector<16x16xf32>
    %92 = arith.mulf %85, %91 : vector<16x16xf32>
    %93 = arith.addf %88, %92 : vector<16x16xf32>
    %c4_i32 = arith.constant 4 : i32
    %c0_42 = arith.constant 0 : index
    %94 = arith.index_cast %c4_i32 : i32 to index
    %c0_43 = arith.constant 0 : index
    %c0_44 = arith.constant 0 : index
    %95 = vector.load %arg2[%c0_42, %94, %c0_43, %c0_44] : memref<1x8x4x16xf32, #tpu.memory_space<vmem>>, vector<1x1x4x16xf32>
    %96 = vector.shape_cast %95 : vector<1x1x4x16xf32> to vector<4x16xf32>
    %cst_45 = arith.constant dense<0.000000e+00> : vector<16x16xf32>
    %97 = tpu.matmul %0, %96, %cst_45 {dimension_numbers = #tpu.dot_dimension_numbers<[1], [0], [0], [1], [0, 0, 1, 1], [], []>} : vector<16x4xf32>, vector<4x16xf32>, vector<16x16xf32> -> vector<16x16xf32>
    %98 = arith.addf %97, %7 : vector<16x16xf32>
    %cst_46 = arith.constant 2.000000e-01 : f32
    %99 = vector.broadcast %cst_46 : f32 to vector<16x16xf32>
    %100 = arith.mulf %99, %98 : vector<16x16xf32>
    %101 = arith.maximumf %98, %100 : vector<16x16xf32>
    %102 = arith.maximumf %81, %101 : vector<16x16xf32>
    %103 = arith.subf %81, %102 : vector<16x16xf32>
    %104 = math.exp %103 : vector<16x16xf32>
    %105 = arith.subf %101, %102 : vector<16x16xf32>
    %106 = math.exp %105 : vector<16x16xf32>
    %107 = arith.mulf %104, %87 : vector<16x16xf32>
    %108 = arith.addf %107, %106 : vector<16x16xf32>
    %109 = arith.mulf %104, %93 : vector<16x16xf32>
    %c0_47 = arith.constant 0 : index
    %110 = arith.index_cast %c4_i32 : i32 to index
    %c0_48 = arith.constant 0 : index
    %c0_49 = arith.constant 0 : index
    %111 = vector.load %arg3[%c0_47, %110, %c0_48, %c0_49] : memref<1x8x16x16xf32, #tpu.memory_space<vmem>>, vector<1x1x16x16xf32>
    %112 = vector.shape_cast %111 : vector<1x1x16x16xf32> to vector<16x16xf32>
    %113 = arith.mulf %106, %112 : vector<16x16xf32>
    %114 = arith.addf %109, %113 : vector<16x16xf32>
    %c5_i32 = arith.constant 5 : i32
    %c0_50 = arith.constant 0 : index
    %115 = arith.index_cast %c5_i32 : i32 to index
    %c0_51 = arith.constant 0 : index
    %c0_52 = arith.constant 0 : index
    %116 = vector.load %arg2[%c0_50, %115, %c0_51, %c0_52] : memref<1x8x4x16xf32, #tpu.memory_space<vmem>>, vector<1x1x4x16xf32>
    %117 = vector.shape_cast %116 : vector<1x1x4x16xf32> to vector<4x16xf32>
    %cst_53 = arith.constant dense<0.000000e+00> : vector<16x16xf32>
    %118 = tpu.matmul %0, %117, %cst_53 {dimension_numbers = #tpu.dot_dimension_numbers<[1], [0], [0], [1], [0, 0, 1, 1], [], []>} : vector<16x4xf32>, vector<4x16xf32>, vector<16x16xf32> -> vector<16x16xf32>
    %119 = arith.addf %118, %7 : vector<16x16xf32>
    %cst_54 = arith.constant 2.000000e-01 : f32
    %120 = vector.broadcast %cst_54 : f32 to vector<16x16xf32>
    %121 = arith.mulf %120, %119 : vector<16x16xf32>
    %122 = arith.maximumf %119, %121 : vector<16x16xf32>
    %123 = arith.maximumf %102, %122 : vector<16x16xf32>
    %124 = arith.subf %102, %123 : vector<16x16xf32>
    %125 = math.exp %124 : vector<16x16xf32>
    %126 = arith.subf %122, %123 : vector<16x16xf32>
    %127 = math.exp %126 : vector<16x16xf32>
    %128 = arith.mulf %125, %108 : vector<16x16xf32>
    %129 = arith.addf %128, %127 : vector<16x16xf32>
    %130 = arith.mulf %125, %114 : vector<16x16xf32>
    %c0_55 = arith.constant 0 : index
    %131 = arith.index_cast %c5_i32 : i32 to index
    %c0_56 = arith.constant 0 : index
    %c0_57 = arith.constant 0 : index
    %132 = vector.load %arg3[%c0_55, %131, %c0_56, %c0_57] : memref<1x8x16x16xf32, #tpu.memory_space<vmem>>, vector<1x1x16x16xf32>
    %133 = vector.shape_cast %132 : vector<1x1x16x16xf32> to vector<16x16xf32>
    %134 = arith.mulf %127, %133 : vector<16x16xf32>
    %135 = arith.addf %130, %134 : vector<16x16xf32>
    %c6_i32 = arith.constant 6 : i32
    %c0_58 = arith.constant 0 : index
    %136 = arith.index_cast %c6_i32 : i32 to index
    %c0_59 = arith.constant 0 : index
    %c0_60 = arith.constant 0 : index
    %137 = vector.load %arg2[%c0_58, %136, %c0_59, %c0_60] : memref<1x8x4x16xf32, #tpu.memory_space<vmem>>, vector<1x1x4x16xf32>
    %138 = vector.shape_cast %137 : vector<1x1x4x16xf32> to vector<4x16xf32>
    %cst_61 = arith.constant dense<0.000000e+00> : vector<16x16xf32>
    %139 = tpu.matmul %0, %138, %cst_61 {dimension_numbers = #tpu.dot_dimension_numbers<[1], [0], [0], [1], [0, 0, 1, 1], [], []>} : vector<16x4xf32>, vector<4x16xf32>, vector<16x16xf32> -> vector<16x16xf32>
    %140 = arith.addf %139, %7 : vector<16x16xf32>
    %cst_62 = arith.constant 2.000000e-01 : f32
    %141 = vector.broadcast %cst_62 : f32 to vector<16x16xf32>
    %142 = arith.mulf %141, %140 : vector<16x16xf32>
    %143 = arith.maximumf %140, %142 : vector<16x16xf32>
    %144 = arith.maximumf %123, %143 : vector<16x16xf32>
    %145 = arith.subf %123, %144 : vector<16x16xf32>
    %146 = math.exp %145 : vector<16x16xf32>
    %147 = arith.subf %143, %144 : vector<16x16xf32>
    %148 = math.exp %147 : vector<16x16xf32>
    %149 = arith.mulf %146, %129 : vector<16x16xf32>
    %150 = arith.addf %149, %148 : vector<16x16xf32>
    %151 = arith.mulf %146, %135 : vector<16x16xf32>
    %c0_63 = arith.constant 0 : index
    %152 = arith.index_cast %c6_i32 : i32 to index
    %c0_64 = arith.constant 0 : index
    %c0_65 = arith.constant 0 : index
    %153 = vector.load %arg3[%c0_63, %152, %c0_64, %c0_65] : memref<1x8x16x16xf32, #tpu.memory_space<vmem>>, vector<1x1x16x16xf32>
    %154 = vector.shape_cast %153 : vector<1x1x16x16xf32> to vector<16x16xf32>
    %155 = arith.mulf %148, %154 : vector<16x16xf32>
    %156 = arith.addf %151, %155 : vector<16x16xf32>
    %c7_i32 = arith.constant 7 : i32
    %c0_66 = arith.constant 0 : index
    %157 = arith.index_cast %c7_i32 : i32 to index
    %c0_67 = arith.constant 0 : index
    %c0_68 = arith.constant 0 : index
    %158 = vector.load %arg2[%c0_66, %157, %c0_67, %c0_68] : memref<1x8x4x16xf32, #tpu.memory_space<vmem>>, vector<1x1x4x16xf32>
    %159 = vector.shape_cast %158 : vector<1x1x4x16xf32> to vector<4x16xf32>
    %cst_69 = arith.constant dense<0.000000e+00> : vector<16x16xf32>
    %160 = tpu.matmul %0, %159, %cst_69 {dimension_numbers = #tpu.dot_dimension_numbers<[1], [0], [0], [1], [0, 0, 1, 1], [], []>} : vector<16x4xf32>, vector<4x16xf32>, vector<16x16xf32> -> vector<16x16xf32>
    %161 = arith.addf %160, %7 : vector<16x16xf32>
    %cst_70 = arith.constant 2.000000e-01 : f32
    %162 = vector.broadcast %cst_70 : f32 to vector<16x16xf32>
    %163 = arith.mulf %162, %161 : vector<16x16xf32>
    %164 = arith.maximumf %161, %163 : vector<16x16xf32>
    %165 = arith.maximumf %144, %164 : vector<16x16xf32>
    %166 = arith.subf %144, %165 : vector<16x16xf32>
    %167 = math.exp %166 : vector<16x16xf32>
    %168 = arith.subf %164, %165 : vector<16x16xf32>
    %169 = math.exp %168 : vector<16x16xf32>
    %170 = arith.mulf %167, %150 : vector<16x16xf32>
    %171 = arith.addf %170, %169 : vector<16x16xf32>
    %172 = arith.mulf %167, %156 : vector<16x16xf32>
    %c0_71 = arith.constant 0 : index
    %173 = arith.index_cast %c7_i32 : i32 to index
    %c0_72 = arith.constant 0 : index
    %c0_73 = arith.constant 0 : index
    %174 = vector.load %arg3[%c0_71, %173, %c0_72, %c0_73] : memref<1x8x16x16xf32, #tpu.memory_space<vmem>>, vector<1x1x16x16xf32>
    %175 = vector.shape_cast %174 : vector<1x1x16x16xf32> to vector<16x16xf32>
    %176 = arith.mulf %169, %175 : vector<16x16xf32>
    %177 = arith.addf %172, %176 : vector<16x16xf32>
    %c8_i32 = arith.constant 8 : i32
    %178 = tpu.reciprocal %171 {approx = true} : vector<16x16xf32> -> vector<16x16xf32>
    %179 = arith.mulf %177, %178 : vector<16x16xf32>
    %c0_74 = arith.constant 0 : index
    %c0_75 = arith.constant 0 : index
    %c0_76 = arith.constant 0 : index
    %180 = vector.load %arg8[%c0_74, %c0_75, %c0_76] : memref<1x16x16xf32, #tpu.memory_space<vmem>>, vector<1x16x16xf32>
    %181 = vector.shape_cast %180 : vector<1x16x16xf32> to vector<16x16xf32>
    %182 = vector.shape_cast %179 : vector<16x16xf32> to vector<1x16x16xf32>
    tpu.vector_store %arg8[%c0_74, %c0_75, %c0_76], %182 {strides = array<i32>} : memref<1x16x16xf32, #tpu.memory_space<vmem>>, vector<1x16x16xf32>,
    return
  }
  func.func @transform_0(%arg0: i32, %arg1: i32) -> (i32, i32, i32, i32) {
    %c0_i32 = arith.constant 0 : i32
    %c0_i32_0 = arith.constant 0 : i32
    %c0_i32_1 = arith.constant 0 : i32
    return %arg0, %c0_i32, %c0_i32_0, %arg1 : i32, i32, i32, i32
  }
  func.func @transform_1(%arg0: i32, %arg1: i32) -> (i32, i32, i32, i32) {
    %c0_i32 = arith.constant 0 : i32
    %c0_i32_0 = arith.constant 0 : i32
    %c0_i32_1 = arith.constant 0 : i32
    return %arg0, %c0_i32, %c0_i32_0, %arg1 : i32, i32, i32, i32
  }
  func.func @transform_2(%arg0: i32, %arg1: i32) -> (i32, i32, i32) {
    %c0_i32 = arith.constant 0 : i32
    %c0_i32_0 = arith.constant 0 : i32
    return %arg0, %c0_i32, %arg1 : i32, i32, i32
  }
  func.func @transform_3(%arg0: i32, %arg1: i32) -> (i32, i32) {
    %c0_i32 = arith.constant 0 : i32
    %c0_i32_0 = arith.constant 0 : i32
    %c0_i32_1 = arith.constant 0 : i32
    return %c0_i32, %c0_i32_0 : i32, i32
  }
  func.func @transform_4(%arg0: i32, %arg1: i32) -> (i32, i32) {
    %c0_i32 = arith.constant 0 : i32
    %c0_i32_0 = arith.constant 0 : i32
    %c0_i32_1 = arith.constant 0 : i32
    return %c0_i32, %c0_i32_0 : i32, i32
  }
  func.func @transform_5(%arg0: i32, %arg1: i32) -> (i32, i32) {
    %c0_i32 = arith.constant 0 : i32
    %c0_i32_0 = arith.constant 0 : i32
    %c0_i32_1 = arith.constant 0 : i32
    return %c0_i32, %c0_i32_0 : i32, i32
  }
  func.func @transform_6(%arg0: i32, %arg1: i32) -> (i32, i32, i32) {
    %c0_i32 = arith.constant 0 : i32
    %c0_i32_0 = arith.constant 0 : i32
    return %arg0, %c0_i32, %arg1 : i32, i32, i32
  }
}

</mosaic_0001>

<llo_original>
// kernel: graph_attention_forward.2
$region0: #{graph_attention_forward.2}
  #allocation0 [shape = 'u32[]', space=smem, size = 0x4, offset = 0x4, fixed_abs, tag = 'smem constant byte address 0x4 - core index']
  #allocation1 [shape = 'u32[144,128]{1,0:T(1,128)}', space=vmem, size = 0x12000, scoped, tag = 'internal scratch']
  %s0 = inlined_call_operand.vmem [shape: f32[2,8,4,16], index: 0, kind: input, shape index: {}]
  %s1 = inlined_call_operand.vmem [shape: f32[16,4], index: 1, kind: input, shape index: {}]
  %s2 = inlined_call_operand.vmem [shape: f32[16,4], index: 2, kind: input, shape index: {}]
  %s3 = inlined_call_operand.vmem [shape: f32[16,1], index: 3, kind: input, shape index: {}]
  %s4 = inlined_call_operand.vmem [shape: f32[2,16,16,8], index: 4, kind: input, shape index: {}]
  %s5 = inlined_call_operand.vmem [shape: f32[2,16,4], index: 5, kind: input, shape index: {}]
  %s6 = inlined_call_operand.hbm [shape: f32[2,16,16], index: 6, kind: output, shape index: {}]
  %s7 = sld [smem:[#allocation0]]
  $region57: #{graph_attention_forward.2} parent=0
    _
  %s9 = ssub.s32 1, %s7
  %s10 = scalar_select 0, %s9, %s7
  $region1: #{graph_attention_forward.2} parent=0
    #allocation2 [shape = 'u8[16384]{0}', space=vmem, size = 0x4000, scoped, tag = 'output window, operand 0']
    #allocation3 [shape = 's32[2]{0}', space=sflag, size = 0x8, scoped, tag = 'scoped memory for graph_attention_forward.2']
    %11 = vsyncpa [#allocation3], 0
    %s12 = scalar_lea.sflag [#allocation3], 1
    %13 = vsyncpa %s12, 0
    loop: start=0, step=1, limit=4
    $region2: #{graph_attention_forward.2} parent=1 // loop_pre_header
      _
    $region3: #{graph_attention_forward.2} parent=1 // loop_header
      %s15 = sphi 0, %s19
      %p16 = scmp.ge.s32.totalorder %s15, 4
      %s22 = sphi 0, %s34
      %s23 = sphi 0, %s30
      %s24 = sphi 0, %s22
      %s25 = sphi 0, %s23
      %s26 = sphi 0, %s24
      %s27 = sphi 0, %s25
      %s39 = sphi 0, %s41
      %s42 = sphi 0, %s39
      %s43 = sphi 0, %s42
      %s59 = sphi 0, %s43
      %s67 = sphi 0, %s69
      %s70 = sphi 0, %s67
      %s71 = sphi 0, %s70
      %s87 = sphi 0, %s71
      %s95 = sphi 0, %s97
      %s98 = sphi 0, %s95
      %s99 = sphi 0, %s98
      %s115 = sphi 0, %s99
      %s119 = sphi 0, %s119
      %s121 = sphi 0, %s119
      %s122 = sphi 0, %s121
      %s136 = sphi 0, %s122
      %s140 = sphi 0, %s140
      %s142 = sphi 0, %s140
      %s143 = sphi 0, %s142
      %s157 = sphi 0, %s143
      %s161 = sphi 0, %s161
      %s163 = sphi 0, %s161
      %s164 = sphi 0, %s163
      %s178 = sphi 0, %s164
      %s186 = sphi 0, %s188
      %s189 = sphi 0, %s186
      %s190 = sphi 0, %s189
      %s206 = sphi 0, %s190
    $region4: #{graph_attention_forward.2} parent=1 // loop_header_branch
      %18 = sbr.rel (%p16) target = $region8
    $region5: #{graph_attention_forward.2} parent=1 // loop_body
      %s20 = ssub.s32 %s15, 1
      %s21 = ssub.s32 %s15, 2
      %s28 = sadd.s32 1, %s23
      %p29 = scmp.ge.s32.totalorder %s28, 1
      %s30 = scalar_select %p29, 0, %s28
      %s31 = sadd.s32 1, %s22
      %s32 = scalar_select %p29, %s31, %s22
      %p33 = scmp.ge.s32.totalorder %s32, 2
      %s34 = scalar_select %p33, 0, %s32
      %s35 = ssub.s32 %s22, %s34
      %s36 = ssub.s32 %s23, %s30
      %s37 = sor.u32 %s35, %s36
      %p38 = scmp.eq.s32.totalorder %s37, 0
      %s40 = sadd.s32 %s39, 1
      %s41 = scalar_select %p38, %s39, %s40
      %p44 = pneg %p38
      %p45 = scmp.eq.s32.totalorder %s15, 1
      %p46 = por %p44, %p45
      %p47 = scmp.ne.s32.totalorder %s39, %s42
      %p48 = scmp.eq.s32.totalorder %s15, 0
      %p49 = por %p47, %p48
      %p50 = scmp.ne.s32.totalorder %s39, %s42
      %p51 = scmp.eq.s32.totalorder %s20, 1
      %p52 = por %p50, %p51
      %p53 = scmp.ne.s32.totalorder %s42, %s43
      %p54 = scmp.eq.s32.totalorder %s20, 0
      %p55 = por %p53, %p54
      %p56 = scmp.ne.s32.totalorder %s42, %s43
      %p57 = scmp.eq.s32.totalorder %s21, 1
      %p58 = por %p56, %p57
      %p60 = scmp.ne.s32.totalorder %s43, %s59
      %p61 = scmp.eq.s32.totalorder %s21, 0
      %p62 = por %p60, %p61
      %s63 = ssub.s32 %s22, %s34
      %s64 = ssub.s32 %s23, %s30
      %s65 = sor.u32 %s63, %s64
      %p66 = scmp.eq.s32.totalorder %s65, 0
      %s68 = sadd.s32 %s67, 1
      %s69 = scalar_select %p66, %s67, %s68
      %p72 = pneg %p66
      %p73 = scmp.eq.s32.totalorder %s15, 1
      %p74 = por %p72, %p73
      %p75 = scmp.ne.s32.totalorder %s67, %s70
      %p76 = scmp.eq.s32.totalorder %s15, 0
      %p77 = por %p75, %p76
      %p78 = scmp.ne.s32.totalorder %s67, %s70
      %p79 = scmp.eq.s32.totalorder %s20, 1
      %p80 = por %p78, %p79
      %p81 = scmp.ne.s32.totalorder %s70, %s71
      %p82 = scmp.eq.s32.totalorder %s20, 0
      %p83 = por %p81, %p82
      %p84 = scmp.ne.s32.totalorder %s70, %s71
      %p85 = scmp.eq.s32.totalorder %s21, 1
      %p86 = por %p84, %p85
      %p88 = scmp.ne.s32.totalorder %s71, %s87
      %p89 = scmp.eq.s32.totalorder %s21, 0
      %p90 = por %p88, %p89
      %s91 = ssub.s32 %s22, %s34
      %s92 = ssub.s32 %s23, %s30
      %s93 = sor.u32 %s91, %s92
      %p94 = scmp.eq.s32.totalorder %s93, 0
      %s96 = sadd.s32 %s95, 1
      %s97 = scalar_select %p94, %s95, %s96
      %p100 = pneg %p94
      %p101 = scmp.eq.s32.totalorder %s15, 1
      %p102 = por %p100, %p101
      %p103 = scmp.ne.s32.totalorder %s95, %s98
      %p104 = scmp.eq.s32.totalorder %s15, 0
      %p105 = por %p103, %p104
      %p106 = scmp.ne.s32.totalorder %s95, %s98
      %p107 = scmp.eq.s32.totalorder %s20, 1
      %p108 = por %p106, %p107
      %p109 = scmp.ne.s32.totalorder %s98, %s99
      %p110 = scmp.eq.s32.totalorder %s20, 0
      %p111 = por %p109, %p110
      %p112 = scmp.ne.s32.totalorder %s98, %s99
      %p113 = scmp.eq.s32.totalorder %s21, 1
      %p114 = por %p112, %p113
      %p116 = scmp.ne.s32.totalorder %s99, %s115
      %p117 = scmp.eq.s32.totalorder %s21, 0
      %p118 = por %p116, %p117
      %s120 = sadd.s32 %s119, 1
      %p123 = scmp.eq.s32.totalorder %s15, 1
      %p124 = scmp.ne.s32.totalorder %s119, %s121
      %p125 = scmp.eq.s32.totalorder %s15, 0
      %p126 = por %p124, %p125
      %p127 = scmp.ne.s32.totalorder %s119, %s121
      %p128 = scmp.eq.s32.totalorder %s20, 1
      %p129 = por %p127, %p128
      %p130 = scmp.ne.s32.totalorder %s121, %s122
      %p131 = scmp.eq.s32.totalorder %s20, 0
      %p132 = por %p130, %p131
      %p133 = scmp.ne.s32.totalorder %s121, %s122
      %p134 = scmp.eq.s32.totalorder %s21, 1
      %p135 = por %p133, %p134
      %p137 = scmp.ne.s32.totalorder %s122, %s136
      %p138 = scmp.eq.s32.totalorder %s21, 0
      %p139 = por %p137, %p138
      %s141 = sadd.s32 %s140, 1
      %p144 = scmp.eq.s32.totalorder %s15, 1
      %p145 = scmp.ne.s32.totalorder %s140, %s142
      %p146 = scmp.eq.s32.totalorder %s15, 0
      %p147 = por %p145, %p146
      %p148 = scmp.ne.s32.totalorder %s140, %s142
      %p149 = scmp.eq.s32.totalorder %s20, 1
      %p150 = por %p148, %p149
      %p151 = scmp.ne.s32.totalorder %s142, %s143
      %p152 = scmp.eq.s32.totalorder %s20, 0
      %p153 = por %p151, %p152
      %p154 = scmp.ne.s32.totalorder %s142, %s143
      %p155 = scmp.eq.s32.totalorder %s21, 1
      %p156 = por %p154, %p155
      %p158 = scmp.ne.s32.totalorder %s143, %s157
      %p159 = scmp.eq.s32.totalorder %s21, 0
      %p160 = por %p158, %p159
      %s162 = sadd.s32 %s161, 1
      %p165 = scmp.eq.s32.totalorder %s15, 1
      %p166 = scmp.ne.s32.totalorder %s161, %s163
      %p167 = scmp.eq.s32.totalorder %s15, 0
      %p168 = por %p166, %p167
      %p169 = scmp.ne.s32.totalorder %s161, %s163
      %p170 = scmp.eq.s32.totalorder %s20, 1
      %p171 = por %p169, %p170
      %p172 = scmp.ne.s32.totalorder %s163, %s164
      %p173 = scmp.eq.s32.totalorder %s20, 0
      %p174 = por %p172, %p173
      %p175 = scmp.ne.s32.totalorder %s163, %s164
      %p176 = scmp.eq.s32.totalorder %s21, 1
      %p177 = por %p175, %p176
      %p179 = scmp.ne.s32.totalorder %s164, %s178
      %p180 = scmp.eq.s32.totalorder %s21, 0
      %p181 = por %p179, %p180
      %s182 = ssub.s32 %s22, %s34
      %s183 = ssub.s32 %s23, %s30
      %s184 = sor.u32 %s182, %s183
      %p185 = scmp.eq.s32.totalorder %s184, 0
      %s187 = sadd.s32 %s186, 1
      %s188 = scalar_select %p185, %s186, %s187
      %p191 = pneg %p185
      %p192 = scmp.eq.s32.totalorder %s15, 1
      %p193 = por %p191, %p192
      %p194 = scmp.ne.s32.totalorder %s186, %s189
      %p195 = scmp.eq.s32.totalorder %s15, 0
      %p196 = por %p194, %p195
      %p197 = scmp.ne.s32.totalorder %s186, %s189
      %p198 = scmp.eq.s32.totalorder %s20, 1
      %p199 = por %p197, %p198
      %p200 = scmp.ne.s32.totalorder %s189, %s190
      %p201 = scmp.eq.s32.totalorder %s20, 0
      %p202 = por %p200, %p201
      %p203 = scmp.ne.s32.totalorder %s189, %s190
      %p204 = scmp.eq.s32.totalorder %s21, 1
      %p205 = por %p203, %p204
      %p207 = scmp.ne.s32.totalorder %s190, %s206
      %p208 = scmp.eq.s32.totalorder %s21, 0
      %p209 = por %p207, %p208
      %p210 = scmp.le.s32.totalorder 1, %s15
      %p211 = scmp.lt.s32.totalorder %s15, 3
      %p212 = pnand %p210, %p211
      %p213 = pneg %p212
      // Predicated region
      $region9: #{graph_attention_forward.2} parent=5 // pred_check
        _
      $region10: #{graph_attention_forward.2} parent=5 // pred_check_branch
        %215 = sbr.rel (%p212) target = $region12
      $region11: #{graph_attention_forward.2} parent=5 // pred_region
        %s216 = ssub.s32 %s15, 1
        // Predicated region
        $region13: #{graph_attention_forward.2} parent=11 // pred_check
          %p217 = pneg %p132
        $region14: #{graph_attention_forward.2} parent=11 // pred_check_branch
          %219 = sbr.rel (%p217) target = $region16
        $region15: #{graph_attention_forward.2} parent=11 // pred_region
          _
        $region16: #{graph_attention_forward.2} parent=11 // pred_fallthru
          _
        // Predicated region
        $region17: #{graph_attention_forward.2} parent=11 // pred_check
          %p220 = pneg %p153
        $region18: #{graph_attention_forward.2} parent=11 // pred_check_branch
          %222 = sbr.rel (%p220) target = $region20
        $region19: #{graph_attention_forward.2} parent=11 // pred_region
          _
        $region20: #{graph_attention_forward.2} parent=11 // pred_fallthru
          _
        // Predicated region
        $region21: #{graph_attention_forward.2} parent=11 // pred_check
          %p223 = pneg %p174
        $region22: #{graph_attention_forward.2} parent=11 // pred_check_branch
          %225 = sbr.rel (%p223) target = $region24
        $region23: #{graph_attention_forward.2} parent=11 // pred_region
          _
        $region24: #{graph_attention_forward.2} parent=11 // pred_fallthru
          _
      $region12: #{graph_attention_forward.2} parent=5 // pred_fallthru
        _
      %p226 = scmp.lt.s32.totalorder %s15, 2
      // Predicated region
      $region25: #{graph_attention_forward.2} parent=5 // pred_check
        %p227 = pneg %p226
      $region26: #{graph_attention_forward.2} parent=5 // pred_check_branch
        %229 = sbr.rel (%p227) target = $region28
      $region27: #{graph_attention_forward.2} parent=5 // pred_region
        // Predicated region
        $region29: #{graph_attention_forward.2} parent=27 // pred_check
          %p230 = pneg %p49
        $region30: #{graph_attention_forward.2} parent=27 // pred_check_branch
          %232 = sbr.rel (%p230) target = $region32
        $region31: #{graph_attention_forward.2} parent=27 // pred_region
          %p233 = scmp.lt.s32.totalorder %s22, 1
          %s234 = scalar_select %p233, %s22, 1
          %p235 = scmp.lt.s32.totalorder %s23, 0
          %s236 = scalar_select %p235, %s23, 0
          %s237 = smul.addr %s234, 8
          %s238 = sadd.s32 %s236, %s237
          %s239 = smul.addr %s238, 4
          %s240 = scalar_lea.vmem %s0, %s239
        $region32: #{graph_attention_forward.2} parent=27 // pred_fallthru
          _
        // Predicated region
        $region33: #{graph_attention_forward.2} parent=27 // pred_check
          %p241 = pneg %p77
        $region34: #{graph_attention_forward.2} parent=27 // pred_check_branch
          %243 = sbr.rel (%p241) target = $region36
        $region35: #{graph_attention_forward.2} parent=27 // pred_region
          %p244 = scmp.lt.s32.totalorder %s22, 1
          %s245 = scalar_select %p244, %s22, 1
          %p246 = scmp.lt.s32.totalorder %s23, 0
          %s247 = scalar_select %p246, %s23, 0
          %s248 = smul.addr %s245, 16
          %s249 = sadd.s32 %s247, %s248
          %s250 = smul.addr %s249, 8
          %s251 = scalar_lea.vmem %s4, %s250
        $region36: #{graph_attention_forward.2} parent=27 // pred_fallthru
          _
        // Predicated region
        $region37: #{graph_attention_forward.2} parent=27 // pred_check
          %p252 = pneg %p105
        $region38: #{graph_attention_forward.2} parent=27 // pred_check_branch
          %254 = sbr.rel (%p252) target = $region40
        $region39: #{graph_attention_forward.2} parent=27 // pred_region
          %p255 = scmp.lt.s32.totalorder %s22, 1
          %s256 = scalar_select %p255, %s22, 1
          %p257 = scmp.lt.s32.totalorder %s23, 0
          %s258 = scalar_select %p257, %s23, 0
          %s259 = sadd.s32 %s258, %s256
          %s260 = smul.addr %s259, 4
          %s261 = scalar_lea.vmem %s5, %s260
        $region40: #{graph_attention_forward.2} parent=27 // pred_fallthru
          _
      $region28: #{graph_attention_forward.2} parent=5 // pred_fallthru
        _
      %p262 = scmp.le.s32.totalorder 1, %s15
      %p263 = scmp.lt.s32.totalorder %s15, 3
      %p264 = pnand %p262, %p263
      %p265 = pneg %p264
      // Predicated region
      $region41: #{graph_attention_forward.2} parent=5 // pred_check
        _
      $region42: #{graph_attention_forward.2} parent=5 // pred_check_branch
        %267 = sbr.rel (%p264) target = $region44
      $region43: #{graph_attention_forward.2} parent=5 // pred_region
        #allocation4 [shape = 'u8[65536]{0}', space=vmem, size = 0x10000, dematerialized = true, scoped, tag = 'FusionAdapter Buffer %fusion.1 = f32[2,8,16,16]{3,2,1,0:T(8,128)} fusion(%param_4.35), kind=kLoop, calls=%fused_computation.2.clone, metadata={op_name="jit(graph_attention_forward)/transpose" stack_frame_id=27}']
        #allocation5 [shape = 'u8[2048]{0}', space=vmem, size = 0x800, dematerialized = true, scoped, tag = 'FusionAdapter Buffer %fusion.4 = f32[2,4,16]{2,1,0:T(4,128)} fusion(%param_5.31), kind=kLoop, calls=%fused_computation.14.clone, metadata={op_name="jit(graph_attention_forward)/transpose" stack_frame_id=8}']
        %s268 = ssub.s32 %s15, 1
        %p269 = scmp.lt.s32.totalorder %s24, 1
        %s270 = scalar_select %p269, %s24, 1
        %p271 = scmp.lt.s32.totalorder %s25, 0
        %s272 = scalar_select %p271, %s25, 0
        %s273 = smul.addr %s270, 8
        %s274 = sadd.s32 %s272, %s273
        %s275 = smul.addr %s274, 4
        %s276 = scalar_lea.vmem %s0, %s275
        %p277 = pneg %p55
        %p278 = pneg %p52
        %p279 = scmp.lt.s32.totalorder %s24, 1
        %s280 = scalar_select %p279, %s24, 1
        %p281 = scmp.lt.s32.totalorder %s25, 0
        %s282 = scalar_select %p281, %s25, 0
        %s283 = smul.addr %s280, 16
        %s284 = sadd.s32 %s282, %s283
        %s285 = smul.addr %s284, 8
        %s286 = scalar_lea.vmem %s4, %s285
        %p287 = pneg %p83
        %p288 = pneg %p80
        %p289 = scmp.lt.s32.totalorder %s24, 1
        %s290 = scalar_select %p289, %s24, 1
        %p291 = scmp.lt.s32.totalorder %s25, 0
        %s292 = scalar_select %p291, %s25, 0
        %s293 = sadd.s32 %s292, %s290
        %s294 = smul.addr %s293, 4
        %s295 = scalar_lea.vmem %s5, %s294
        %p296 = pneg %p111
        %p297 = pneg %p108
        %p298 = pneg %p132
        %p299 = pneg %p129
        %p300 = pneg %p153
        %p301 = pneg %p150
        %p302 = pneg %p174
        %p303 = pneg %p171
        %p304 = pneg %p202
        %p305 = pneg %p199
        %s306 = sand.u32 %s189, 1
        %s307 = scalar_lea.sflag [#allocation3], %s306
        %s308 = sand.u32 %s189, 1
        %s309 = smul.addr %s308, 16
        %s310 = scalar_lea.vmem [#allocation2], %s309
        %p311 = scmp.lt.s32.totalorder %s24, 1
        %s312 = scalar_select %p311, %s24, 1
        %p313 = scmp.lt.s32.totalorder %s25, 0
        %s314 = scalar_select %p313, %s25, 0
        %s315 = smul.addr %s312, 8
        %s316 = sadd.s32 %s314, %s315
        %s317 = smul.addr %s316, 4
        %s318 = scalar_lea.vmem %s0, %s317
        %p319 = scmp.lt.s32.totalorder %s24, 1
        %s320 = scalar_select %p319, %s24, 1
        %p321 = scmp.lt.s32.totalorder %s25, 0
        %s322 = scalar_select %p321, %s25, 0
        %s323 = smul.addr %s320, 16
        %s324 = sadd.s32 %s322, %s323
        %s325 = smul.addr %s324, 8
        %s326 = scalar_lea.vmem %s4, %s325
        %p327 = scmp.lt.s32.totalorder %s24, 1
        %s328 = scalar_select %p327, %s24, 1
        %p329 = scmp.lt.s32.totalorder %s25, 0
        %s330 = scalar_select %p329, %s25, 0
        %s331 = sadd.s32 %s330, %s328
        %s332 = smul.addr %s331, 4
        %s333 = scalar_lea.vmem %s5, %s332
        %v334 = vld [vmem:[%s326] sm:$0xff]
        %336 = vst [vmem:[#allocation4] sm:$0xff] %v334
        %s337 = scalar_lea.vmem %s326, 8
        %v338 = vld [vmem:[%s337] sm:$0xff]
        %s339 = scalar_lea.vmem [#allocation4], 8
        %341 = vst [vmem:[%s339] sm:$0xff] %v338
        %s342 = scalar_lea.vmem %s326, 16
        %v343 = vld [vmem:[%s342] sm:$0xff]
        %s344 = scalar_lea.vmem [#allocation4], 16
        %346 = vst [vmem:[%s344] sm:$0xff] %v343
        %s347 = scalar_lea.vmem %s326, 24
        %v348 = vld [vmem:[%s347] sm:$0xff]
        %s349 = scalar_lea.vmem [#allocation4], 24
        %351 = vst [vmem:[%s349] sm:$0xff] %v348
        %s352 = scalar_lea.vmem %s326, 32
        %v353 = vld [vmem:[%s352] sm:$0xff]
        %s354 = scalar_lea.vmem [#allocation4], 32
        %356 = vst [vmem:[%s354] sm:$0xff] %v353
        %s357 = scalar_lea.vmem %s326, 40
        %v358 = vld [vmem:[%s357] sm:$0xff]
        %s359 = scalar_lea.vmem [#allocation4], 40
        %361 = vst [vmem:[%s359] sm:$0xff] %v358
        %s362 = scalar_lea.vmem %s326, 48
        %v363 = vld [vmem:[%s362] sm:$0xff]
        %s364 = scalar_lea.vmem [#allocation4], 48
        %366 = vst [vmem:[%s364] sm:$0xff] %v363
        %s367 = scalar_lea.vmem %s326, 56
        %v368 = vld [vmem:[%s367] sm:$0xff]
        %s369 = scalar_lea.vmem [#allocation4], 56
        %371 = vst [vmem:[%s369] sm:$0xff] %v368
        %s372 = scalar_lea.vmem %s326, 64
        %v373 = vld [vmem:[%s372] sm:$0xff]
        %s374 = scalar_lea.vmem [#allocation4], 64
        %376 = vst [vmem:[%s374] sm:$0xff] %v373
        %s377 = scalar_lea.vmem %s326, 72
        %v378 = vld [vmem:[%s377] sm:$0xff]
        %s379 = scalar_lea.vmem [#allocation4], 72
        %381 = vst [vmem:[%s379] sm:$0xff] %v378
        %s382 = scalar_lea.vmem %s326, 80
        %v383 = vld [vmem:[%s382] sm:$0xff]
        %s384 = scalar_lea.vmem [#allocation4], 80
        %386 = vst [vmem:[%s384] sm:$0xff] %v383
        %s387 = scalar_lea.vmem %s326, 88
        %v388 = vld [vmem:[%s387] sm:$0xff]
        %s389 = scalar_lea.vmem [#allocation4], 88
        %391 = vst [vmem:[%s389] sm:$0xff] %v388
        %s392 = scalar_lea.vmem %s326, 96
        %v393 = vld [vmem:[%s392] sm:$0xff]
        %s394 = scalar_lea.vmem [#allocation4], 96
        %396 = vst [vmem:[%s394] sm:$0xff] %v393
        %s397 = scalar_lea.vmem %s326, 104
        %v398 = vld [vmem:[%s397] sm:$0xff]
        %s399 = scalar_lea.vmem [#allocation4], 104
        %401 = vst [vmem:[%s399] sm:$0xff] %v398
        %s402 = scalar_lea.vmem %s326, 112
        %v403 = vld [vmem:[%s402] sm:$0xff]
        %s404 = scalar_lea.vmem [#allocation4], 112
        %406 = vst [vmem:[%s404] sm:$0xff] %v403
        %s407 = scalar_lea.vmem %s326, 120
        %v408 = vld [vmem:[%s407] sm:$0xff]
        %s409 = scalar_lea.vmem [#allocation4], 120
        %411 = vst [vmem:[%s409] sm:$0xff] %v408
        %v412 = vld [vmem:[%s333] sm:$0xf]
        %414 = vst [vmem:[#allocation5] sm:$0xf] %v412
        %v415 = vld [vmem:[%s1] sm:$0xff]
        %v416 = vld [vmem:[%s1 + $0x8] sm:$0xff]
        %v417 = vld [vmem:[%s2] sm:$0xff]
        %v418 = vld [vmem:[%s2 + $0x8] sm:$0xff]
        %v419 = vld [vmem:[#allocation5] sm:$0xf]
        %v420 = vld [vmem:[%s3] sm:$0xff]
        %v421 = vld [vmem:[%s3 + $0x8] sm:$0xff]
        %423 = vset.pattern.permute.xlu0 0
        %424 = vperm.xlu0 %423, %v420
        %v425 = vpop.permute.xlu0 %424
        %428 = vset.pattern.permute.xlu0 0
        %429 = vperm.xlu0 %428, %v421
        %v430 = vpop.permute.xlu0 %429
        %vm432 = vcmask 31744
        %v434 = vsel %vm432, %v417, 0
        %v437 = vsel %vm432, %v418, 0
        %vm439 = vcmask 1043456
        %v441 = vsel %vm439, %v419, 0
        %443 = vmatprep.subr.mxu0 0.0
        %444 = vmatpush1.msra.mxu0 %v441
        %445 = vmatprep.subr.mxu0 0.0
        %446 = vmatpush1.msra.mxu0 0.0
        %447 = vmatprep.subr.mxu0 0.0
        %448 = vmatpush1.msra.mxu0 0.0
        %449 = vmatprep.subr.mxu0 0.0
        %450 = vmatpush1.msra.mxu0 0.0
        %451 = vmatprep.subr.mxu0 0.0
        %452 = vmatpush1.msra.mxu0 0.0
        %453 = vmatprep.subr.mxu0 0.0
        %454 = vmatpush1.msra.mxu0 0.0
        %455 = vmatprep.subr.mxu0 0.0
        %456 = vmatpush1.msra.mxu0 0.0
        %457 = vmatprep.subr.mxu0 0.0
        %458 = vmatpush1.msra.mxu0 0.0
        %459 = vmatprep.subr.mxu0 0.0
        %460 = vmatpush1.msra.mxu0 0.0
        %461 = vmatprep.subr.mxu0 0.0
        %462 = vmatpush1.msra.mxu0 0.0
        %463 = vmatprep.subr.mxu0 0.0
        %464 = vmatpush1.msra.mxu0 0.0
        %465 = vmatprep.subr.mxu0 0.0
        %466 = vmatpush1.msra.mxu0 0.0
        %467 = vmatprep.subr.mxu0 0.0
        %468 = vmatpush1.msra.mxu0 0.0
        %469 = vmatprep.subr.mxu0 0.0
        %470 = vmatpush1.msra.mxu0 0.0
        %471 = vmatprep.subr.mxu0 0.0
        %472 = vmatpush1.msra.mxu0 0.0
        %473 = vmatprep.subr.mxu0 0.0
        %474 = vmatpush1.msra.mxu0 0.0
        %475 = vmatprep.subr.mxu0 0.0
        %476 = vmatpush1.msra.mxu0 0.0
        %477 = vmatprep.subr.mxu0 0.0
        %478 = vmatpush1.msra.mxu0 0.0
        %479 = vmatprep.subr.mxu0 0.0
        %480 = vmatpush1.msra.mxu0 0.0
        %481 = vmatprep.subr.mxu0 0.0
        %482 = vmatpush1.msra.mxu0 0.0
        %483 = vmatprep.subr.mxu0 0.0
        %484 = vmatpush1.msra.mxu0 0.0
        %485 = vmatprep.subr.mxu0 0.0
        %486 = vmatpush1.msra.mxu0 0.0
        %487 = vmatprep.subr.mxu0 0.0
        %488 = vmatpush1.msra.mxu0 0.0
        %489 = vmatprep.subr.mxu0 0.0
        %490 = vmatpush1.msra.mxu0 0.0
        %491 = vmatprep.subr.mxu0 0.0
        %492 = vmatpush1.msra.mxu0 0.0
        %493 = vmatprep.subr.mxu0 0.0
        %494 = vmatpush1.msra.mxu0 0.0
        %495 = vmatprep.subr.mxu0 0.0
        %496 = vmatpush1.msra.mxu0 0.0
        %497 = vmatprep.subr.mxu0 0.0
        %498 = vmatpush1.msra.mxu0 0.0
        %499 = vmatprep.subr.mxu0 0.0
        %500 = vmatpush1.msra.mxu0 0.0
        %501 = vmatprep.subr.mxu0 0.0
        %502 = vmatpush1.msra.mxu0 0.0
        %503 = vmatprep.subr.mxu0 0.0
        %504 = vmatpush1.msra.mxu0 0.0
        %505 = vmatprep.subr.mxu0 0.0
        %506 = vmatpush1.msra.mxu0 0.0
        %507 = vmatprep.mubr.f32.mxu0 0.0
        %508 = vmatmul.mubr.f32.gmra.mrb[0].mxu0 %v434
        %v509 = vpop.f32.mrb[0].mxu0
        %v510 = vadd.f32 %v425, %v509
        %v511 = vpop.f32.mrb[0].mxu0
        %512 = vmatprep.mubr.f32.mxu0 0.0
        %513 = vmatmul.mubr.f32.gmra.mrb[0].mxu0 %v437
        %v514 = vpop.f32.mrb[0].mxu0
        %v515 = vadd.f32 %v430, %v514
        %v516 = vpop.f32.mrb[0].mxu0
        %517 = vdwg.mxu0
        %v518 = vld [vmem:[%s318] sm:$0xf]
        %v520 = vsel %vm432, %v415, 0
        %v523 = vsel %vm432, %v416, 0
        %v526 = vsel %vm439, %v518, 0
        %528 = vmatprep.subr.mxu0 0.0
        %529 = vmatpush1.msra.mxu0 %v526
        %530 = vmatprep.subr.mxu0 0.0
        %531 = vmatpush1.msra.mxu0 0.0
        %532 = vmatprep.subr.mxu0 0.0
        %533 = vmatpush1.msra.mxu0 0.0
        %534 = vmatprep.subr.mxu0 0.0
        %535 = vmatpush1.msra.mxu0 0.0
        %536 = vmatprep.subr.mxu0 0.0
        %537 = vmatpush1.msra.mxu0 0.0
        %538 = vmatprep.subr.mxu0 0.0
        %539 = vmatpush1.msra.mxu0 0.0
        %540 = vmatprep.subr.mxu0 0.0
        %541 = vmatpush1.msra.mxu0 0.0
        %542 = vmatprep.subr.mxu0 0.0
        %543 = vmatpush1.msra.mxu0 0.0
        %544 = vmatprep.subr.mxu0 0.0
        %545 = vmatpush1.msra.mxu0 0.0
        %546 = vmatprep.subr.mxu0 0.0
        %547 = vmatpush1.msra.mxu0 0.0
        %548 = vmatprep.subr.mxu0 0.0
        %549 = vmatpush1.msra.mxu0 0.0
        %550 = vmatprep.subr.mxu0 0.0
        %551 = vmatpush1.msra.mxu0 0.0
        %552 = vmatprep.subr.mxu0 0.0
        %553 = vmatpush1.msra.mxu0 0.0
        %554 = vmatprep.subr.mxu0 0.0
        %555 = vmatpush1.msra.mxu0 0.0
        %556 = vmatprep.subr.mxu0 0.0
        %557 = vmatpush1.msra.mxu0 0.0
        %558 = vmatprep.subr.mxu0 0.0
        %559 = vmatpush1.msra.mxu0 0.0
        %560 = vmatprep.subr.mxu0 0.0
        %561 = vmatpush1.msra.mxu0 0.0
        %562 = vmatprep.subr.mxu0 0.0
        %563 = vmatpush1.msra.mxu0 0.0
        %564 = vmatprep.subr.mxu0 0.0
        %565 = vmatpush1.msra.mxu0 0.0
        %566 = vmatprep.subr.mxu0 0.0
        %567 = vmatpush1.msra.mxu0 0.0
        %568 = vmatprep.subr.mxu0 0.0
        %569 = vmatpush1.msra.mxu0 0.0
        %570 = vmatprep.subr.mxu0 0.0
        %571 = vmatpush1.msra.mxu0 0.0
        %572 = vmatprep.subr.mxu0 0.0
        %573 = vmatpush1.msra.mxu0 0.0
        %574 = vmatprep.subr.mxu0 0.0
        %575 = vmatpush1.msra.mxu0 0.0
        %576 = vmatprep.subr.mxu0 0.0
        %577 = vmatpush1.msra.mxu0 0.0
        %578 = vmatprep.subr.mxu0 0.0
        %579 = vmatpush1.msra.mxu0 0.0
        %580 = vmatprep.subr.mxu0 0.0
        %581 = vmatpush1.msra.mxu0 0.0
        %582 = vmatprep.subr.mxu0 0.0
        %583 = vmatpush1.msra.mxu0 0.0
        %584 = vmatprep.subr.mxu0 0.0
        %585 = vmatpush1.msra.mxu0 0.0
        %586 = vmatprep.subr.mxu0 0.0
        %587 = vmatpush1.msra.mxu0 0.0
        %588 = vmatprep.subr.mxu0 0.0
        %589 = vmatpush1.msra.mxu0 0.0
        %590 = vmatprep.subr.mxu0 0.0
        %591 = vmatpush1.msra.mxu0 0.0
        %592 = vmatprep.mubr.f32.mxu0 0.0
        %593 = vmatmul.mubr.f32.gmra.mrb[0].mxu0 %v520
        %v594 = vpop.f32.mrb[0].mxu0
        %v595 = vadd.f32 %v510, %v594
        %v596 = vpop.f32.mrb[0].mxu0
        %597 = vmatprep.mubr.f32.mxu0 0.0
        %598 = vmatmul.mubr.f32.gmra.mrb[0].mxu0 %v523
        %v599 = vpop.f32.mrb[0].mxu0
        %v600 = vadd.f32 %v515, %v599
        %v601 = vpop.f32.mrb[0].mxu0
        %602 = vdwg.mxu0
        %v603 = vmul.f32 %v595, 0.2
        %v604 = vmul.f32 %v600, 0.2
        %v605 = vmax.f32 %v595, %v603
        %v606 = vmax.f32 %v600, %v604
        %v607 = vsub.f32 -inf, %v605
        %v608 = vsub.f32 -inf, %v606
        %v609 = vmul.f32 %v607, 1.442695
        %v610 = vpow.pop %v609
        %v611 = vmul.f32 %v608, 1.442695
        %v612 = vpow.pop %v611
        %v613 = vsub.f32 %v605, %v605
        %v614 = vsub.f32 %v606, %v606
        %v615 = vmul.f32 %v613, 1.442695
        %v616 = vpow.pop %v615
        %v617 = vmul.f32 %v614, 1.442695
        %v618 = vpow.pop %v617
        %v619 = vmul.f32 %v610, 0.0
        %v620 = vmul.f32 %v612, 0.0
        %v621 = vadd.f32 %v619, %v616
        %v622 = vadd.f32 %v620, %v618
        %v623 = vld [vmem:[#allocation4] sm:$0xff]
        %v624 = vld [vmem:[#allocation4 + $0x8] sm:$0xff]
        %v625 = vmul.f32 %v616, %v623
        %v626 = vmul.f32 %v618, %v624
        %v627 = vadd.f32 %v619, %v625
        %v628 = vadd.f32 %v620, %v626
        %s629 = scalar_lea.vmem %s318, 4
        %v630 = vld [vmem:[%s629] sm:$0xf]
        %v632 = vsel %vm439, %v630, 0
        %634 = vmatprep.subr.mxu0 0.0
        %635 = vmatpush1.msra.mxu0 %v632
        %636 = vmatprep.subr.mxu0 0.0
        %637 = vmatpush1.msra.mxu0 0.0
        %638 = vmatprep.subr.mxu0 0.0
        %639 = vmatpush1.msra.mxu0 0.0
        %640 = vmatprep.subr.mxu0 0.0
        %641 = vmatpush1.msra.mxu0 0.0
        %642 = vmatprep.subr.mxu0 0.0
        %643 = vmatpush1.msra.mxu0 0.0
        %644 = vmatprep.subr.mxu0 0.0
        %645 = vmatpush1.msra.mxu0 0.0
        %646 = vmatprep.subr.mxu0 0.0
        %647 = vmatpush1.msra.mxu0 0.0
        %648 = vmatprep.subr.mxu0 0.0
        %649 = vmatpush1.msra.mxu0 0.0
        %650 = vmatprep.subr.mxu0 0.0
        %651 = vmatpush1.msra.mxu0 0.0
        %652 = vmatprep.subr.mxu0 0.0
        %653 = vmatpush1.msra.mxu0 0.0
        %654 = vmatprep.subr.mxu0 0.0
        %655 = vmatpush1.msra.mxu0 0.0
        %656 = vmatprep.subr.mxu0 0.0
        %657 = vmatpush1.msra.mxu0 0.0
        %658 = vmatprep.subr.mxu0 0.0
        %659 = vmatpush1.msra.mxu0 0.0
        %660 = vmatprep.subr.mxu0 0.0
        %661 = vmatpush1.msra.mxu0 0.0
        %662 = vmatprep.subr.mxu0 0.0
        %663 = vmatpush1.msra.mxu0 0.0
        %664 = vmatprep.subr.mxu0 0.0
        %665 = vmatpush1.msra.mxu0 0.0
        %666 = vmatprep.subr.mxu0 0.0
        %667 = vmatpush1.msra.mxu0 0.0
        %668 = vmatprep.subr.mxu0 0.0
        %669 = vmatpush1.msra.mxu0 0.0
        %670 = vmatprep.subr.mxu0 0.0
        %671 = vmatpush1.msra.mxu0 0.0
        %672 = vmatprep.subr.mxu0 0.0
        %673 = vmatpush1.msra.mxu0 0.0
        %674 = vmatprep.subr.mxu0 0.0
        %675 = vmatpush1.msra.mxu0 0.0
        %676 = vmatprep.subr.mxu0 0.0
        %677 = vmatpush1.msra.mxu0 0.0
        %678 = vmatprep.subr.mxu0 0.0
        %679 = vmatpush1.msra.mxu0 0.0
        %680 = vmatprep.subr.mxu0 0.0
        %681 = vmatpush1.msra.mxu0 0.0
        %682 = vmatprep.subr.mxu0 0.0
        %683 = vmatpush1.msra.mxu0 0.0
        %684 = vmatprep.subr.mxu0 0.0
        %685 = vmatpush1.msra.mxu0 0.0
        %686 = vmatprep.subr.mxu0 0.0
        %687 = vmatpush1.msra.mxu0 0.0
        %688 = vmatprep.subr.mxu0 0.0
        %689 = vmatpush1.msra.mxu0 0.0
        %690 = vmatprep.subr.mxu0 0.0
        %691 = vmatpush1.msra.mxu0 0.0
        %692 = vmatprep.subr.mxu0 0.0
        %693 = vmatpush1.msra.mxu0 0.0
        %694 = vmatprep.subr.mxu0 0.0
        %695 = vmatpush1.msra.mxu0 0.0
        %696 = vmatprep.subr.mxu0 0.0
        %697 = vmatpush1.msra.mxu0 0.0
        %698 = vmatprep.mubr.f32.mxu0 0.0
        %699 = vmatmul.mubr.f32.gmra.mrb[0].mxu0 %v520
        %v700 = vpop.f32.mrb[0].mxu0
        %v701 = vadd.f32 %v510, %v700
        %v702 = vpop.f32.mrb[0].mxu0
        %703 = vmatprep.mubr.f32.mxu0 0.0
        %704 = vmatmul.mubr.f32.gmra.mrb[0].mxu0 %v523
        %v705 = vpop.f32.mrb[0].mxu0
        %v706 = vadd.f32 %v515, %v705
        %v707 = vpop.f32.mrb[0].mxu0
        %708 = vdwg.mxu0
        %v709 = vmul.f32 %v701, 0.2
        %v710 = vmul.f32 %v706, 0.2
        %v711 = vmax.f32 %v701, %v709
        %v712 = vmax.f32 %v706, %v710
        %v713 = vmax.f32 %v605, %v711
        %v714 = vmax.f32 %v606, %v712
        %v715 = vsub.f32 %v605, %v713
        %v716 = vsub.f32 %v606, %v714
        %v717 = vmul.f32 %v715, 1.442695
        %v718 = vpow.pop %v717
        %v719 = vmul.f32 %v716, 1.442695
        %v720 = vpow.pop %v719
        %v721 = vsub.f32 %v711, %v713
        %v722 = vsub.f32 %v712, %v714
        %v723 = vmul.f32 %v721, 1.442695
        %v724 = vpow.pop %v723
        %v725 = vmul.f32 %v722, 1.442695
        %v726 = vpow.pop %v725
        %v727 = vmul.f32 %v718, %v621
        %v728 = vmul.f32 %v720, %v622
        %v729 = vadd.f32 %v727, %v724
        %v730 = vadd.f32 %v728, %v726
        %v731 = vmul.f32 %v718, %v627
        %v732 = vmul.f32 %v720, %v628
        %s733 = scalar_lea.vmem [#allocation4], 16
        %v734 = vld [vmem:[%s733] sm:$0xff]
        %v735 = vld [vmem:[%s733 + $0x8] sm:$0xff]
        %v736 = vmul.f32 %v724, %v734
        %v737 = vmul.f32 %v726, %v735
        %v738 = vadd.f32 %v731, %v736
        %v739 = vadd.f32 %v732, %v737
        %s740 = scalar_lea.vmem %s318, 8
        %v741 = vld [vmem:[%s740] sm:$0xf]
        %v743 = vsel %vm439, %v741, 0
        %745 = vmatprep.subr.mxu0 0.0
        %746 = vmatpush1.msra.mxu0 %v743
        %747 = vmatprep.subr.mxu0 0.0
        %748 = vmatpush1.msra.mxu0 0.0
        %749 = vmatprep.subr.mxu0 0.0
        %750 = vmatpush1.msra.mxu0 0.0
        %751 = vmatprep.subr.mxu0 0.0
        %752 = vmatpush1.msra.mxu0 0.0
        %753 = vmatprep.subr.mxu0 0.0
        %754 = vmatpush1.msra.mxu0 0.0
        %755 = vmatprep.subr.mxu0 0.0
        %756 = vmatpush1.msra.mxu0 0.0
        %757 = vmatprep.subr.mxu0 0.0
        %758 = vmatpush1.msra.mxu0 0.0
        %759 = vmatprep.subr.mxu0 0.0
        %760 = vmatpush1.msra.mxu0 0.0
        %761 = vmatprep.subr.mxu0 0.0
        %762 = vmatpush1.msra.mxu0 0.0
        %763 = vmatprep.subr.mxu0 0.0
        %764 = vmatpush1.msra.mxu0 0.0
        %765 = vmatprep.subr.mxu0 0.0
        %766 = vmatpush1.msra.mxu0 0.0
        %767 = vmatprep.subr.mxu0 0.0
        %768 = vmatpush1.msra.mxu0 0.0
        %769 = vmatprep.subr.mxu0 0.0
        %770 = vmatpush1.msra.mxu0 0.0
        %771 = vmatprep.subr.mxu0 0.0
        %772 = vmatpush1.msra.mxu0 0.0
        %773 = vmatprep.subr.mxu0 0.0
        %774 = vmatpush1.msra.mxu0 0.0
        %775 = vmatprep.subr.mxu0 0.0
        %776 = vmatpush1.msra.mxu0 0.0
        %777 = vmatprep.subr.mxu0 0.0
        %778 = vmatpush1.msra.mxu0 0.0
        %779 = vmatprep.subr.mxu0 0.0
        %780 = vmatpush1.msra.mxu0 0.0
        %781 = vmatprep.subr.mxu0 0.0
        %782 = vmatpush1.msra.mxu0 0.0
        %783 = vmatprep.subr.mxu0 0.0
        %784 = vmatpush1.msra.mxu0 0.0
        %785 = vmatprep.subr.mxu0 0.0
        %786 = vmatpush1.msra.mxu0 0.0
        %787 = vmatprep.subr.mxu0 0.0
        %788 = vmatpush1.msra.mxu0 0.0
        %789 = vmatprep.subr.mxu0 0.0
        %790 = vmatpush1.msra.mxu0 0.0
        %791 = vmatprep.subr.mxu0 0.0
        %792 = vmatpush1.msra.mxu0 0.0
        %793 = vmatprep.subr.mxu0 0.0
        %794 = vmatpush1.msra.mxu0 0.0
        %795 = vmatprep.subr.mxu0 0.0
        %796 = vmatpush1.msra.mxu0 0.0
        %797 = vmatprep.subr.mxu0 0.0
        %798 = vmatpush1.msra.mxu0 0.0
        %799 = vmatprep.subr.mxu0 0.0
        %800 = vmatpush1.msra.mxu0 0.0
        %801 = vmatprep.subr.mxu0 0.0
        %802 = vmatpush1.msra.mxu0 0.0
        %803 = vmatprep.subr.mxu0 0.0
        %804 = vmatpush1.msra.mxu0 0.0
        %805 = vmatprep.subr.mxu0 0.0
        %806 = vmatpush1.msra.mxu0 0.0
        %807 = vmatprep.subr.mxu0 0.0
        %808 = vmatpush1.msra.mxu0 0.0
        %809 = vmatprep.mubr.f32.mxu0 0.0
        %810 = vmatmul.mubr.f32.gmra.mrb[0].mxu0 %v520
        %v811 = vpop.f32.mrb[0].mxu0
        %v812 = vadd.f32 %v510, %v811
        %v813 = vpop.f32.mrb[0].mxu0
        %814 = vmatprep.mubr.f32.mxu0 0.0
        %815 = vmatmul.mubr.f32.gmra.mrb[0].mxu0 %v523
        %v816 = vpop.f32.mrb[0].mxu0
        %v817 = vadd.f32 %v515, %v816
        %v818 = vpop.f32.mrb[0].mxu0
        %819 = vdwg.mxu0
        %v820 = vmul.f32 %v812, 0.2
        %v821 = vmul.f32 %v817, 0.2
        %v822 = vmax.f32 %v812, %v820
        %v823 = vmax.f32 %v817, %v821
        %v824 = vmax.f32 %v713, %v822
        %v825 = vmax.f32 %v714, %v823
        %v826 = vsub.f32 %v713, %v824
        %v827 = vsub.f32 %v714, %v825
        %v828 = vmul.f32 %v826, 1.442695
        %v829 = vpow.pop %v828
        %v830 = vmul.f32 %v827, 1.442695
        %v831 = vpow.pop %v830
        %v832 = vsub.f32 %v822, %v824
        %v833 = vsub.f32 %v823, %v825
        %v834 = vmul.f32 %v832, 1.442695
        %v835 = vpow.pop %v834
        %v836 = vmul.f32 %v833, 1.442695
        %v837 = vpow.pop %v836
        %v838 = vmul.f32 %v829, %v729
        %v839 = vmul.f32 %v831, %v730
        %v840 = vadd.f32 %v838, %v835
        %v841 = vadd.f32 %v839, %v837
        %v842 = vmul.f32 %v829, %v738
        %v843 = vmul.f32 %v831, %v739
        %s844 = scalar_lea.vmem [#allocation4], 32
        %v845 = vld [vmem:[%s844] sm:$0xff]
        %v846 = vld [vmem:[%s844 + $0x8] sm:$0xff]
        %v847 = vmul.f32 %v835, %v845
        %v848 = vmul.f32 %v837, %v846
        %v849 = vadd.f32 %v842, %v847
        %v850 = vadd.f32 %v843, %v848
        %s851 = scalar_lea.vmem %s318, 12
        %v852 = vld [vmem:[%s851] sm:$0xf]
        %v854 = vsel %vm439, %v852, 0
        %856 = vmatprep.subr.mxu0 0.0
        %857 = vmatpush1.msra.mxu0 %v854
        %858 = vmatprep.subr.mxu0 0.0
        %859 = vmatpush1.msra.mxu0 0.0
        %860 = vmatprep.subr.mxu0 0.0
        %861 = vmatpush1.msra.mxu0 0.0
        %862 = vmatprep.subr.mxu0 0.0
        %863 = vmatpush1.msra.mxu0 0.0
        %864 = vmatprep.subr.mxu0 0.0
        %865 = vmatpush1.msra.mxu0 0.0
        %866 = vmatprep.subr.mxu0 0.0
        %867 = vmatpush1.msra.mxu0 0.0
        %868 = vmatprep.subr.mxu0 0.0
        %869 = vmatpush1.msra.mxu0 0.0
        %870 = vmatprep.subr.mxu0 0.0
        %871 = vmatpush1.msra.mxu0 0.0
        %872 = vmatprep.subr.mxu0 0.0
        %873 = vmatpush1.msra.mxu0 0.0
        %874 = vmatprep.subr.mxu0 0.0
        %875 = vmatpush1.msra.mxu0 0.0
        %876 = vmatprep.subr.mxu0 0.0
        %877 = vmatpush1.msra.mxu0 0.0
        %878 = vmatprep.subr.mxu0 0.0
        %879 = vmatpush1.msra.mxu0 0.0
        %880 = vmatprep.subr.mxu0 0.0
        %881 = vmatpush1.msra.mxu0 0.0
        %882 = vmatprep.subr.mxu0 0.0
        %883 = vmatpush1.msra.mxu0 0.0
        %884 = vmatprep.subr.mxu0 0.0
        %885 = vmatpush1.msra.mxu0 0.0
        %886 = vmatprep.subr.mxu0 0.0
        %887 = vmatpush1.msra.mxu0 0.0
        %888 = vmatprep.subr.mxu0 0.0
        %889 = vmatpush1.msra.mxu0 0.0
        %890 = vmatprep.subr.mxu0 0.0
        %891 = vmatpush1.msra.mxu0 0.0
        %892 = vmatprep.subr.mxu0 0.0
        %893 = vmatpush1.msra.mxu0 0.0
        %894 = vmatprep.subr.mxu0 0.0
        %895 = vmatpush1.msra.mxu0 0.0
        %896 = vmatprep.subr.mxu0 0.0
        %897 = vmatpush1.msra.mxu0 0.0
        %898 = vmatprep.subr.mxu0 0.0
        %899 = vmatpush1.msra.mxu0 0.0
        %900 = vmatprep.subr.mxu0 0.0
        %901 = vmatpush1.msra.mxu0 0.0
        %902 = vmatprep.subr.mxu0 0.0
        %903 = vmatpush1.msra.mxu0 0.0
        %904 = vmatprep.subr.mxu0 0.0
        %905 = vmatpush1.msra.mxu0 0.0
        %906 = vmatprep.subr.mxu0 0.0
        %907 = vmatpush1.msra.mxu0 0.0
        %908 = vmatprep.subr.mxu0 0.0
        %909 = vmatpush1.msra.mxu0 0.0
        %910 = vmatprep.subr.mxu0 0.0
        %911 = vmatpush1.msra.mxu0 0.0
        %912 = vmatprep.subr.mxu0 0.0
        %913 = vmatpush1.msra.mxu0 0.0
        %914 = vmatprep.subr.mxu0 0.0
        %915 = vmatpush1.msra.mxu0 0.0
        %916 = vmatprep.subr.mxu0 0.0
        %917 = vmatpush1.msra.mxu0 0.0
        %918 = vmatprep.subr.mxu0 0.0
        %919 = vmatpush1.msra.mxu0 0.0
        %920 = vmatprep.mubr.f32.mxu0 0.0
        %921 = vmatmul.mubr.f32.gmra.mrb[0].mxu0 %v520
        %v922 = vpop.f32.mrb[0].mxu0
        %v923 = vadd.f32 %v510, %v922
        %v924 = vpop.f32.mrb[0].mxu0
        %925 = vmatprep.mubr.f32.mxu0 0.0
        %926 = vmatmul.mubr.f32.gmra.mrb[0].mxu0 %v523
        %v927 = vpop.f32.mrb[0].mxu0
        %v928 = vadd.f32 %v515, %v927
        %v929 = vpop.f32.mrb[0].mxu0
        %930 = vdwg.mxu0
        %v931 = vmul.f32 %v923, 0.2
        %v932 = vmul.f32 %v928, 0.2
        %v933 = vmax.f32 %v923, %v931
        %v934 = vmax.f32 %v928, %v932
        %v935 = vmax.f32 %v824, %v933
        %v936 = vmax.f32 %v825, %v934
        %v937 = vsub.f32 %v824, %v935
        %v938 = vsub.f32 %v825, %v936
        %v939 = vmul.f32 %v937, 1.442695
        %v940 = vpow.pop %v939
        %v941 = vmul.f32 %v938, 1.442695
        %v942 = vpow.pop %v941
        %v943 = vsub.f32 %v933, %v935
        %v944 = vsub.f32 %v934, %v936
        %v945 = vmul.f32 %v943, 1.442695
        %v946 = vpow.pop %v945
        %v947 = vmul.f32 %v944, 1.442695
        %v948 = vpow.pop %v947
        %v949 = vmul.f32 %v940, %v840
        %v950 = vmul.f32 %v942, %v841
        %v951 = vadd.f32 %v949, %v946
        %v952 = vadd.f32 %v950, %v948
        %v953 = vmul.f32 %v940, %v849
        %v954 = vmul.f32 %v942, %v850
        %s955 = scalar_lea.vmem [#allocation4], 48
        %v956 = vld [vmem:[%s955] sm:$0xff]
        %v957 = vld [vmem:[%s955 + $0x8] sm:$0xff]
        %v958 = vmul.f32 %v946, %v956
        %v959 = vmul.f32 %v948, %v957
        %v960 = vadd.f32 %v953, %v958
        %v961 = vadd.f32 %v954, %v959
        %s962 = scalar_lea.vmem %s318, 16
        %v963 = vld [vmem:[%s962] sm:$0xf]
        %v965 = vsel %vm439, %v963, 0
        %967 = vmatprep.subr.mxu0 0.0
        %968 = vmatpush1.msra.mxu0 %v965
        %969 = vmatprep.subr.mxu0 0.0
        %970 = vmatpush1.msra.mxu0 0.0
        %971 = vmatprep.subr.mxu0 0.0
        %972 = vmatpush1.msra.mxu0 0.0
        %973 = vmatprep.subr.mxu0 0.0
        %974 = vmatpush1.msra.mxu0 0.0
        %975 = vmatprep.subr.mxu0 0.0
        %976 = vmatpush1.msra.mxu0 0.0
        %977 = vmatprep.subr.mxu0 0.0
        %978 = vmatpush1.msra.mxu0 0.0
        %979 = vmatprep.subr.mxu0 0.0
        %980 = vmatpush1.msra.mxu0 0.0
        %981 = vmatprep.subr.mxu0 0.0
        %982 = vmatpush1.msra.mxu0 0.0
        %983 = vmatprep.subr.mxu0 0.0
        %984 = vmatpush1.msra.mxu0 0.0
        %985 = vmatprep.subr.mxu0 0.0
        %986 = vmatpush1.msra.mxu0 0.0
        %987 = vmatprep.subr.mxu0 0.0
        %988 = vmatpush1.msra.mxu0 0.0
        %989 = vmatprep.subr.mxu0 0.0
        %990 = vmatpush1.msra.mxu0 0.0
        %991 = vmatprep.subr.mxu0 0.0
        %992 = vmatpush1.msra.mxu0 0.0
        %993 = vmatprep.subr.mxu0 0.0
        %994 = vmatpush1.msra.mxu0 0.0
        %995 = vmatprep.subr.mxu0 0.0
        %996 = vmatpush1.msra.mxu0 0.0
        %997 = vmatprep.subr.mxu0 0.0
        %998 = vmatpush1.msra.mxu0 0.0
        %999 = vmatprep.subr.mxu0 0.0
        %1000 = vmatpush1.msra.mxu0 0.0
        %1001 = vmatprep.subr.mxu0 0.0
        %1002 = vmatpush1.msra.mxu0 0.0
        %1003 = vmatprep.subr.mxu0 0.0
        %1004 = vmatpush1.msra.mxu0 0.0
        %1005 = vmatprep.subr.mxu0 0.0
        %1006 = vmatpush1.msra.mxu0 0.0
        %1007 = vmatprep.subr.mxu0 0.0
        %1008 = vmatpush1.msra.mxu0 0.0
        %1009 = vmatprep.subr.mxu0 0.0
        %1010 = vmatpush1.msra.mxu0 0.0
        %1011 = vmatprep.subr.mxu0 0.0
        %1012 = vmatpush1.msra.mxu0 0.0
        %1013 = vmatprep.subr.mxu0 0.0
        %1014 = vmatpush1.msra.mxu0 0.0
        %1015 = vmatprep.subr.mxu0 0.0
        %1016 = vmatpush1.msra.mxu0 0.0
        %1017 = vmatprep.subr.mxu0 0.0
        %1018 = vmatpush1.msra.mxu0 0.0
        %1019 = vmatprep.subr.mxu0 0.0
        %1020 = vmatpush1.msra.mxu0 0.0
        %1021 = vmatprep.subr.mxu0 0.0
        %1022 = vmatpush1.msra.mxu0 0.0
        %1023 = vmatprep.subr.mxu0 0.0
        %1024 = vmatpush1.msra.mxu0 0.0
        %1025 = vmatprep.subr.mxu0 0.0
        %1026 = vmatpush1.msra.mxu0 0.0
        %1027 = vmatprep.subr.mxu0 0.0
        %1028 = vmatpush1.msra.mxu0 0.0
        %1029 = vmatprep.subr.mxu0 0.0
        %1030 = vmatpush1.msra.mxu0 0.0
        %1031 = vmatprep.mubr.f32.mxu0 0.0
        %1032 = vmatmul.mubr.f32.gmra.mrb[0].mxu0 %v520
        %v1033 = vpop.f32.mrb[0].mxu0
        %v1034 = vadd.f32 %v510, %v1033
        %v1035 = vpop.f32.mrb[0].mxu0
        %1036 = vmatprep.mubr.f32.mxu0 0.0
        %1037 = vmatmul.mubr.f32.gmra.mrb[0].mxu0 %v523
        %v1038 = vpop.f32.mrb[0].mxu0
        %v1039 = vadd.f32 %v515, %v1038
        %v1040 = vpop.f32.mrb[0].mxu0
        %1041 = vdwg.mxu0
        %v1042 = vmul.f32 %v1034, 0.2
        %v1043 = vmul.f32 %v1039, 0.2
        %v1044 = vmax.f32 %v1034, %v1042
        %v1045 = vmax.f32 %v1039, %v1043
        %v1046 = vmax.f32 %v935, %v1044
        %v1047 = vmax.f32 %v936, %v1045
        %v1048 = vsub.f32 %v935, %v1046
        %v1049 = vsub.f32 %v936, %v1047
        %v1050 = vmul.f32 %v1048, 1.442695
        %v1051 = vpow.pop %v1050
        %v1052 = vmul.f32 %v1049, 1.442695
        %v1053 = vpow.pop %v1052
        %v1054 = vsub.f32 %v1044, %v1046
        %v1055 = vsub.f32 %v1045, %v1047
        %v1056 = vmul.f32 %v1054, 1.442695
        %v1057 = vpow.pop %v1056
        %v1058 = vmul.f32 %v1055, 1.442695
        %v1059 = vpow.pop %v1058
        %v1060 = vmul.f32 %v1051, %v951
        %v1061 = vmul.f32 %v1053, %v952
        %v1062 = vadd.f32 %v1060, %v1057
        %v1063 = vadd.f32 %v1061, %v1059
        %v1064 = vmul.f32 %v1051, %v960
        %v1065 = vmul.f32 %v1053, %v961
        %s1066 = scalar_lea.vmem [#allocation4], 64
        %v1067 = vld [vmem:[%s1066] sm:$0xff]
        %v1068 = vld [vmem:[%s1066 + $0x8] sm:$0xff]
        %v1069 = vmul.f32 %v1057, %v1067
        %v1070 = vmul.f32 %v1059, %v1068
        %v1071 = vadd.f32 %v1064, %v1069
        %v1072 = vadd.f32 %v1065, %v1070
        %s1073 = scalar_lea.vmem %s318, 20
        %v1074 = vld [vmem:[%s1073] sm:$0xf]
        %v1076 = vsel %vm439, %v1074, 0
        %1078 = vmatprep.subr.mxu0 0.0
        %1079 = vmatpush1.msra.mxu0 %v1076
        %1080 = vmatprep.subr.mxu0 0.0
        %1081 = vmatpush1.msra.mxu0 0.0
        %1082 = vmatprep.subr.mxu0 0.0
        %1083 = vmatpush1.msra.mxu0 0.0
        %1084 = vmatprep.subr.mxu0 0.0
        %1085 = vmatpush1.msra.mxu0 0.0
        %1086 = vmatprep.subr.mxu0 0.0
        %1087 = vmatpush1.msra.mxu0 0.0
        %1088 = vmatprep.subr.mxu0 0.0
        %1089 = vmatpush1.msra.mxu0 0.0
        %1090 = vmatprep.subr.mxu0 0.0
        %1091 = vmatpush1.msra.mxu0 0.0
        %1092 = vmatprep.subr.mxu0 0.0
        %1093 = vmatpush1.msra.mxu0 0.0
        %1094 = vmatprep.subr.mxu0 0.0
        %1095 = vmatpush1.msra.mxu0 0.0
        %1096 = vmatprep.subr.mxu0 0.0
        %1097 = vmatpush1.msra.mxu0 0.0
        %1098 = vmatprep.subr.mxu0 0.0
        %1099 = vmatpush1.msra.mxu0 0.0
        %1100 = vmatprep.subr.mxu0 0.0
        %1101 = vmatpush1.msra.mxu0 0.0
        %1102 = vmatprep.subr.mxu0 0.0
        %1103 = vmatpush1.msra.mxu0 0.0
        %1104 = vmatprep.subr.mxu0 0.0
        %1105 = vmatpush1.msra.mxu0 0.0
        %1106 = vmatprep.subr.mxu0 0.0
        %1107 = vmatpush1.msra.mxu0 0.0
        %1108 = vmatprep.subr.mxu0 0.0
        %1109 = vmatpush1.msra.mxu0 0.0
        %1110 = vmatprep.subr.mxu0 0.0
        %1111 = vmatpush1.msra.mxu0 0.0
        %1112 = vmatprep.subr.mxu0 0.0
        %1113 = vmatpush1.msra.mxu0 0.0
        %1114 = vmatprep.subr.mxu0 0.0
        %1115 = vmatpush1.msra.mxu0 0.0
        %1116 = vmatprep.subr.mxu0 0.0
        %1117 = vmatpush1.msra.mxu0 0.0
        %1118 = vmatprep.subr.mxu0 0.0
        %1119 = vmatpush1.msra.mxu0 0.0
        %1120 = vmatprep.subr.mxu0 0.0
        %1121 = vmatpush1.msra.mxu0 0.0
        %1122 = vmatprep.subr.mxu0 0.0
        %1123 = vmatpush1.msra.mxu0 0.0
        %1124 = vmatprep.subr.mxu0 0.0
        %1125 = vmatpush1.msra.mxu0 0.0
        %1126 = vmatprep.subr.mxu0 0.0
        %1127 = vmatpush1.msra.mxu0 0.0
        %1128 = vmatprep.subr.mxu0 0.0
        %1129 = vmatpush1.msra.mxu0 0.0
        %1130 = vmatprep.subr.mxu0 0.0
        %1131 = vmatpush1.msra.mxu0 0.0
        %1132 = vmatprep.subr.mxu0 0.0
        %1133 = vmatpush1.msra.mxu0 0.0
        %1134 = vmatprep.subr.mxu0 0.0
        %1135 = vmatpush1.msra.mxu0 0.0
        %1136 = vmatprep.subr.mxu0 0.0
        %1137 = vmatpush1.msra.mxu0 0.0
        %1138 = vmatprep.subr.mxu0 0.0
        %1139 = vmatpush1.msra.mxu0 0.0
        %1140 = vmatprep.subr.mxu0 0.0
        %1141 = vmatpush1.msra.mxu0 0.0
        %1142 = vmatprep.mubr.f32.mxu0 0.0
        %1143 = vmatmul.mubr.f32.gmra.mrb[0].mxu0 %v520
        %v1144 = vpop.f32.mrb[0].mxu0
        %v1145 = vadd.f32 %v510, %v1144
        %v1146 = vpop.f32.mrb[0].mxu0
        %1147 = vmatprep.mubr.f32.mxu0 0.0
        %1148 = vmatmul.mubr.f32.gmra.mrb[0].mxu0 %v523
        %v1149 = vpop.f32.mrb[0].mxu0
        %v1150 = vadd.f32 %v515, %v1149
        %v1151 = vpop.f32.mrb[0].mxu0
        %1152 = vdwg.mxu0
        %v1153 = vmul.f32 %v1145, 0.2
        %v1154 = vmul.f32 %v1150, 0.2
        %v1155 = vmax.f32 %v1145, %v1153
        %v1156 = vmax.f32 %v1150, %v1154
        %v1157 = vmax.f32 %v1046, %v1155
        %v1158 = vmax.f32 %v1047, %v1156
        %v1159 = vsub.f32 %v1046, %v1157
        %v1160 = vsub.f32 %v1047, %v1158
        %v1161 = vmul.f32 %v1159, 1.442695
        %v1162 = vpow.pop %v1161
        %v1163 = vmul.f32 %v1160, 1.442695
        %v1164 = vpow.pop %v1163
        %v1165 = vsub.f32 %v1155, %v1157
        %v1166 = vsub.f32 %v1156, %v1158
        %v1167 = vmul.f32 %v1165, 1.442695
        %v1168 = vpow.pop %v1167
        %v1169 = vmul.f32 %v1166, 1.442695
        %v1170 = vpow.pop %v1169
        %v1171 = vmul.f32 %v1162, %v1062
        %v1172 = vmul.f32 %v1164, %v1063
        %v1173 = vadd.f32 %v1171, %v1168
        %v1174 = vadd.f32 %v1172, %v1170
        %v1175 = vmul.f32 %v1162, %v1071
        %v1176 = vmul.f32 %v1164, %v1072
        %s1177 = scalar_lea.vmem [#allocation4], 80
        %v1178 = vld [vmem:[%s1177] sm:$0xff]
        %v1179 = vld [vmem:[%s1177 + $0x8] sm:$0xff]
        %v1180 = vmul.f32 %v1168, %v1178
        %v1181 = vmul.f32 %v1170, %v1179
        %v1182 = vadd.f32 %v1175, %v1180
        %v1183 = vadd.f32 %v1176, %v1181
        %s1184 = scalar_lea.vmem %s318, 24
        %v1185 = vld [vmem:[%s1184] sm:$0xf]
        %v1187 = vsel %vm439, %v1185, 0
        %1189 = vmatprep.subr.mxu0 0.0
        %1190 = vmatpush1.msra.mxu0 %v1187
        %1191 = vmatprep.subr.mxu0 0.0
        %1192 = vmatpush1.msra.mxu0 0.0
        %1193 = vmatprep.subr.mxu0 0.0
        %1194 = vmatpush1.msra.mxu0 0.0
        %1195 = vmatprep.subr.mxu0 0.0
        %1196 = vmatpush1.msra.mxu0 0.0
        %1197 = vmatprep.subr.mxu0 0.0
        %1198 = vmatpush1.msra.mxu0 0.0
        %1199 = vmatprep.subr.mxu0 0.0
        %1200 = vmatpush1.msra.mxu0 0.0
        %1201 = vmatprep.subr.mxu0 0.0
        %1202 = vmatpush1.msra.mxu0 0.0
        %1203 = vmatprep.subr.mxu0 0.0
        %1204 = vmatpush1.msra.mxu0 0.0
        %1205 = vmatprep.subr.mxu0 0.0
        %1206 = vmatpush1.msra.mxu0 0.0
        %1207 = vmatprep.subr.mxu0 0.0
        %1208 = vmatpush1.msra.mxu0 0.0
        %1209 = vmatprep.subr.mxu0 0.0
        %1210 = vmatpush1.msra.mxu0 0.0
        %1211 = vmatprep.subr.mxu0 0.0
        %1212 = vmatpush1.msra.mxu0 0.0
        %1213 = vmatprep.subr.mxu0 0.0
        %1214 = vmatpush1.msra.mxu0 0.0
        %1215 = vmatprep.subr.mxu0 0.0
        %1216 = vmatpush1.msra.mxu0 0.0
        %1217 = vmatprep.subr.mxu0 0.0
        %1218 = vmatpush1.msra.mxu0 0.0
        %1219 = vmatprep.subr.mxu0 0.0
        %1220 = vmatpush1.msra.mxu0 0.0
        %1221 = vmatprep.subr.mxu0 0.0
        %1222 = vmatpush1.msra.mxu0 0.0
        %1223 = vmatprep.subr.mxu0 0.0
        %1224 = vmatpush1.msra.mxu0 0.0
        %1225 = vmatprep.subr.mxu0 0.0
        %1226 = vmatpush1.msra.mxu0 0.0
        %1227 = vmatprep.subr.mxu0 0.0
        %1228 = vmatpush1.msra.mxu0 0.0
        %1229 = vmatprep.subr.mxu0 0.0
        %1230 = vmatpush1.msra.mxu0 0.0
        %1231 = vmatprep.subr.mxu0 0.0
        %1232 = vmatpush1.msra.mxu0 0.0
        %1233 = vmatprep.subr.mxu0 0.0
        %1234 = vmatpush1.msra.mxu0 0.0
        %1235 = vmatprep.subr.mxu0 0.0
        %1236 = vmatpush1.msra.mxu0 0.0
        %1237 = vmatprep.subr.mxu0 0.0
        %1238 = vmatpush1.msra.mxu0 0.0
        %1239 = vmatprep.subr.mxu0 0.0
        %1240 = vmatpush1.msra.mxu0 0.0
        %1241 = vmatprep.subr.mxu0 0.0
        %1242 = vmatpush1.msra.mxu0 0.0
        %1243 = vmatprep.subr.mxu0 0.0
        %1244 = vmatpush1.msra.mxu0 0.0
        %1245 = vmatprep.subr.mxu0 0.0
        %1246 = vmatpush1.msra.mxu0 0.0
        %1247 = vmatprep.subr.mxu0 0.0
        %1248 = vmatpush1.msra.mxu0 0.0
        %1249 = vmatprep.subr.mxu0 0.0
        %1250 = vmatpush1.msra.mxu0 0.0
        %1251 = vmatprep.subr.mxu0 0.0
        %1252 = vmatpush1.msra.mxu0 0.0
        %1253 = vmatprep.mubr.f32.mxu0 0.0
        %1254 = vmatmul.mubr.f32.gmra.mrb[0].mxu0 %v520
        %v1255 = vpop.f32.mrb[0].mxu0
        %v1256 = vadd.f32 %v510, %v1255
        %v1257 = vpop.f32.mrb[0].mxu0
        %1258 = vmatprep.mubr.f32.mxu0 0.0
        %1259 = vmatmul.mubr.f32.gmra.mrb[0].mxu0 %v523
        %v1260 = vpop.f32.mrb[0].mxu0
        %v1261 = vadd.f32 %v515, %v1260
        %v1262 = vpop.f32.mrb[0].mxu0
        %1263 = vdwg.mxu0
        %v1264 = vmul.f32 %v1256, 0.2
        %v1265 = vmul.f32 %v1261, 0.2
        %v1266 = vmax.f32 %v1256, %v1264
        %v1267 = vmax.f32 %v1261, %v1265
        %v1268 = vmax.f32 %v1157, %v1266
        %v1269 = vmax.f32 %v1158, %v1267
        %v1270 = vsub.f32 %v1157, %v1268
        %v1271 = vsub.f32 %v1158, %v1269
        %v1272 = vmul.f32 %v1270, 1.442695
        %v1273 = vpow.pop %v1272
        %v1274 = vmul.f32 %v1271, 1.442695
        %v1275 = vpow.pop %v1274
        %v1276 = vsub.f32 %v1266, %v1268
        %v1277 = vsub.f32 %v1267, %v1269
        %v1278 = vmul.f32 %v1276, 1.442695
        %v1279 = vpow.pop %v1278
        %v1280 = vmul.f32 %v1277, 1.442695
        %v1281 = vpow.pop %v1280
        %v1282 = vmul.f32 %v1273, %v1173
        %v1283 = vmul.f32 %v1275, %v1174
        %v1284 = vadd.f32 %v1282, %v1279
        %v1285 = vadd.f32 %v1283, %v1281
        %v1286 = vmul.f32 %v1273, %v1182
        %v1287 = vmul.f32 %v1275, %v1183
        %s1288 = scalar_lea.vmem [#allocation4], 96
        %v1289 = vld [vmem:[%s1288] sm:$0xff]
        %v1290 = vld [vmem:[%s1288 + $0x8] sm:$0xff]
        %v1291 = vmul.f32 %v1279, %v1289
        %v1292 = vmul.f32 %v1281, %v1290
        %v1293 = vadd.f32 %v1286, %v1291
        %v1294 = vadd.f32 %v1287, %v1292
        %s1295 = scalar_lea.vmem %s318, 28
        %v1296 = vld [vmem:[%s1295] sm:$0xf]
        %v1298 = vsel %vm439, %v1296, 0
        %1300 = vmatprep.subr.mxu0 0.0
        %1301 = vmatpush1.msra.mxu0 %v1298
        %1302 = vmatprep.subr.mxu0 0.0
        %1303 = vmatpush1.msra.mxu0 0.0
        %1304 = vmatprep.subr.mxu0 0.0
        %1305 = vmatpush1.msra.mxu0 0.0
        %1306 = vmatprep.subr.mxu0 0.0
        %1307 = vmatpush1.msra.mxu0 0.0
        %1308 = vmatprep.subr.mxu0 0.0
        %1309 = vmatpush1.msra.mxu0 0.0
        %1310 = vmatprep.subr.mxu0 0.0
        %1311 = vmatpush1.msra.mxu0 0.0
        %1312 = vmatprep.subr.mxu0 0.0
        %1313 = vmatpush1.msra.mxu0 0.0
        %1314 = vmatprep.subr.mxu0 0.0
        %1315 = vmatpush1.msra.mxu0 0.0
        %1316 = vmatprep.subr.mxu0 0.0
        %1317 = vmatpush1.msra.mxu0 0.0
        %1318 = vmatprep.subr.mxu0 0.0
        %1319 = vmatpush1.msra.mxu0 0.0
        %1320 = vmatprep.subr.mxu0 0.0
        %1321 = vmatpush1.msra.mxu0 0.0
        %1322 = vmatprep.subr.mxu0 0.0
        %1323 = vmatpush1.msra.mxu0 0.0
        %1324 = vmatprep.subr.mxu0 0.0
        %1325 = vmatpush1.msra.mxu0 0.0
        %1326 = vmatprep.subr.mxu0 0.0
        %1327 = vmatpush1.msra.mxu0 0.0
        %1328 = vmatprep.subr.mxu0 0.0
        %1329 = vmatpush1.msra.mxu0 0.0
        %1330 = vmatprep.subr.mxu0 0.0
        %1331 = vmatpush1.msra.mxu0 0.0
        %1332 = vmatprep.subr.mxu0 0.0
        %1333 = vmatpush1.msra.mxu0 0.0
        %1334 = vmatprep.subr.mxu0 0.0
        %1335 = vmatpush1.msra.mxu0 0.0
        %1336 = vmatprep.subr.mxu0 0.0
        %1337 = vmatpush1.msra.mxu0 0.0
        %1338 = vmatprep.subr.mxu0 0.0
        %1339 = vmatpush1.msra.mxu0 0.0
        %1340 = vmatprep.subr.mxu0 0.0
        %1341 = vmatpush1.msra.mxu0 0.0
        %1342 = vmatprep.subr.mxu0 0.0
        %1343 = vmatpush1.msra.mxu0 0.0
        %1344 = vmatprep.subr.mxu0 0.0
        %1345 = vmatpush1.msra.mxu0 0.0
        %1346 = vmatprep.subr.mxu0 0.0
        %1347 = vmatpush1.msra.mxu0 0.0
        %1348 = vmatprep.subr.mxu0 0.0
        %1349 = vmatpush1.msra.mxu0 0.0
        %1350 = vmatprep.subr.mxu0 0.0
        %1351 = vmatpush1.msra.mxu0 0.0
        %1352 = vmatprep.subr.mxu0 0.0
        %1353 = vmatpush1.msra.mxu0 0.0
        %1354 = vmatprep.subr.mxu0 0.0
        %1355 = vmatpush1.msra.mxu0 0.0
        %1356 = vmatprep.subr.mxu0 0.0
        %1357 = vmatpush1.msra.mxu0 0.0
        %1358 = vmatprep.subr.mxu0 0.0
        %1359 = vmatpush1.msra.mxu0 0.0
        %1360 = vmatprep.subr.mxu0 0.0
        %1361 = vmatpush1.msra.mxu0 0.0
        %1362 = vmatprep.subr.mxu0 0.0
        %1363 = vmatpush1.msra.mxu0 0.0
        %1364 = vmatprep.mubr.f32.mxu0 0.0
        %1365 = vmatmul.mubr.f32.gmra.mrb[0].mxu0 %v520
        %v1366 = vpop.f32.mrb[0].mxu0
        %v1367 = vadd.f32 %v510, %v1366
        %v1368 = vpop.f32.mrb[0].mxu0
        %1369 = vmatprep.mubr.f32.mxu0 0.0
        %1370 = vmatmul.mubr.f32.gmra.mrb[0].mxu0 %v523
        %v1371 = vpop.f32.mrb[0].mxu0
        %v1372 = vadd.f32 %v515, %v1371
        %v1373 = vpop.f32.mrb[0].mxu0
        %1374 = vdwg.mxu0
        %v1375 = vmul.f32 %v1367, 0.2
        %v1376 = vmul.f32 %v1372, 0.2
        %v1377 = vmax.f32 %v1367, %v1375
        %v1378 = vmax.f32 %v1372, %v1376
        %v1379 = vmax.f32 %v1268, %v1377
        %v1380 = vmax.f32 %v1269, %v1378
        %v1381 = vsub.f32 %v1268, %v1379
        %v1382 = vsub.f32 %v1269, %v1380
        %v1383 = vmul.f32 %v1381, 1.442695
        %v1384 = vpow.pop %v1383
        %v1385 = vmul.f32 %v1382, 1.442695
        %v1386 = vpow.pop %v1385
        %v1387 = vsub.f32 %v1377, %v1379
        %v1388 = vsub.f32 %v1378, %v1380
        %v1389 = vmul.f32 %v1387, 1.442695
        %v1390 = vpow.pop %v1389
        %v1391 = vmul.f32 %v1388, 1.442695
        %v1392 = vpow.pop %v1391
        %v1393 = vmul.f32 %v1384, %v1284
        %v1394 = vmul.f32 %v1386, %v1285
        %v1395 = vadd.f32 %v1393, %v1390
        %v1396 = vadd.f32 %v1394, %v1392
        %v1397 = vmul.f32 %v1384, %v1293
        %v1398 = vmul.f32 %v1386, %v1294
        %s1399 = scalar_lea.vmem [#allocation4], 112
        %v1400 = vld [vmem:[%s1399] sm:$0xff]
        %v1401 = vld [vmem:[%s1399 + $0x8] sm:$0xff]
        %v1402 = vmul.f32 %v1390, %v1400
        %v1403 = vmul.f32 %v1392, %v1401
        %v1404 = vadd.f32 %v1397, %v1402
        %v1405 = vadd.f32 %v1398, %v1403
        %v1406 = vrcp.pop %v1395
        %v1407 = vrcp.pop %v1396
        %v1408 = vmul.f32 %v1404, %v1406
        %v1409 = vmul.f32 %v1405, %v1407
        %vm1410 = vcmask 130048
        %1411 = vst.msk [vmem:[%s310] sm:$0xff] %vm1410, %v1408
        %1412 = vst.msk [vmem:[%s310 + $0x8] sm:$0xff] %vm1410, %v1409
        %s1413 = sand.u32 %s189, 1
        %s1414 = scalar_lea.sflag [#allocation3], %s1413
        %s1415 = sand.u32 %s189, 1
        %s1416 = smul.addr %s1415, 16
        %s1417 = scalar_lea.vmem [#allocation2], %s1416
        // Predicated region
        $region45: #{graph_attention_forward.2} parent=43 // pred_check
          %p1418 = pneg %p199
        $region46: #{graph_attention_forward.2} parent=43 // pred_check_branch
          %1420 = sbr.rel (%p1418) target = $region48
        $region47: #{graph_attention_forward.2} parent=43 // pred_region
          %s1422 = ssub.s32 256, 256
          %1423 = vsyncadd %s1414, %s1422
          %s1424 = smul.addr %s24, 2
          %s1425 = sadd.s32 %s25, %s1424
          %s1426 = smul.addr %s1425, 128
          %s1427 = scalar_lea.hbm %s6, %s1426
          %s1428 = sshll.u32 %s1417, 4
          %s1429 = int_to_ptr.vmem [resolvable:$true] %s1428
          %1434 = dma.vmem_to_hbm [thread:$0]  %s1429, 256, %s1427, %s1414, 128, 128, 8
        $region48: #{graph_attention_forward.2} parent=43 // pred_fallthru
          _
      $region44: #{graph_attention_forward.2} parent=5 // pred_fallthru
        _
      %p1435 = scmp.le.s32.totalorder 2, %s15
      // Predicated region
      $region49: #{graph_attention_forward.2} parent=5 // pred_check
        %p1436 = pneg %p1435
      $region50: #{graph_attention_forward.2} parent=5 // pred_check_branch
        %1438 = sbr.rel (%p1436) target = $region52
      $region51: #{graph_attention_forward.2} parent=5 // pred_region
        %s1439 = ssub.s32 %s15, 2
        // Predicated region
        $region53: #{graph_attention_forward.2} parent=51 // pred_check
          %p1440 = pneg %p205
        $region54: #{graph_attention_forward.2} parent=51 // pred_check_branch
          %1442 = sbr.rel (%p1440) target = $region56
        $region55: #{graph_attention_forward.2} parent=51 // pred_region
          %s1443 = sand.u32 %s190, 1
          %s1444 = scalar_lea.sflag [#allocation3], %s1443
          %s1445 = sand.u32 %s190, 1
          %s1446 = smul.addr %s1445, 16
          %s1447 = scalar_lea.vmem [#allocation2], %s1446
          %1448 = dma.done %s1444, 256
        $region56: #{graph_attention_forward.2} parent=51 // pred_fallthru
          _
      $region52: #{graph_attention_forward.2} parent=5 // pred_fallthru
        _
    $region6: #{graph_attention_forward.2} parent=1 // loop_footer
      %s19 = sadd.s32 1, %s15
    $region7: #{graph_attention_forward.2} parent=1 // loop_footer_branch
      %14 = sbr.rel target = $region3
    $region8: #{graph_attention_forward.2} parent=1 // loop_exit
      _
    %1449 = vsyncpa [#allocation3], 1
    %s1450 = scalar_lea.sflag [#allocation3], 1
    %1451 = vsyncpa %s1450, 1

</llo_original>
